<compile_context>
chip_gen: v7x
topology: tpu7x:2x2x1
jax: 0.10.0
libtpu: 0.0.40
codegen_flags: <defaults>
</compile_context>

<pallas_src>
import math
import jax
import jax.numpy as jnp
from jax import lax
from jax.experimental import pallas as pl
from jax.experimental.pallas import tpu as pltpu

# ----------------------------- config ---------------------------------------
CONFIG = {
    "embedding_dim_ids": 16,
    "embedding_dim_features": 8,
    "final_mlp_embed_dim": 32,
}

# synthetic vocabulary sizes (stand-ins for len(feature_encoders[col].classes_))
USER_VOCAB = 50
ITEM_VOCAB = 60
USER_FEATURE_VOCABS = {"segment_idx": 6, "beh_segment_idx": 9, "active_ind_idx": 3}
ITEM_FEATURE_VOCABS = {"item_type_idx": 12, "item_descrip_idx": 20}

D_ID = CONFIG["embedding_dim_ids"]          # 16
D_FEAT = CONFIG["embedding_dim_features"]   # 8
D_OUT = CONFIG["final_mlp_embed_dim"]       # 32

USER_VOCABS = [USER_VOCAB] + list(USER_FEATURE_VOCABS.values())   # [50, 6, 9, 3]
ITEM_VOCABS = [ITEM_VOCAB] + list(ITEM_FEATURE_VOCABS.values())   # [60, 12, 20]
ALL_VOCABS = USER_VOCABS + ITEM_VOCABS
ALL_DIMS = ([D_ID] + [D_FEAT] * len(USER_FEATURE_VOCABS)
            + [D_ID] + [D_FEAT] * len(ITEM_FEATURE_VOCABS))       # [16,8,8,8,16,8,8]
NUM_FEATS = len(ALL_VOCABS)                                       # 7

USER_TOTAL = D_ID + D_FEAT * len(USER_FEATURE_VOCABS)   # 40
ITEM_TOTAL = D_ID + D_FEAT * len(ITEM_FEATURE_VOCABS)   # 32
USER_HIDDEN = USER_TOTAL // 2                            # 20
ITEM_HIDDEN = ITEM_TOTAL // 2                            # 16


def _round_up(x, m):
    return (x + m - 1) // m * m


V_TOTAL = sum(ALL_VOCABS)                 # 160 combined (offset) vocabulary
E_TOTAL = sum(ALL_DIMS)                   # 72  concatenated embedding width
H_TOTAL = USER_HIDDEN + ITEM_HIDDEN       # 36  fused hidden width
O_TOTAL = 2 * D_OUT                       # 64  fused [user_repr | item_repr]

V_PAD = _round_up(V_TOTAL, 128)           # 256
E_PAD = _round_up(E_TOTAL, 128)           # 128
H_PAD = _round_up(H_TOTAL, 128)           # 128
O_PAD = _round_up(O_TOTAL, 128)           # 128

# offsets of each feature's vocabulary inside the combined vocabulary
VOCAB_OFFSETS = [0]
for _v in ALL_VOCABS[:-1]:
    VOCAB_OFFSETS.append(VOCAB_OFFSETS[-1] + _v)   # [0, 50, 56, 65, 68, 128, 140]


# --------------------------- param init -------------------------------------
def xavier_uniform(key, shape):
    fan_in, fan_out = shape[0], shape[1]
    bound = math.sqrt(6.0 / (fan_in + fan_out))
    return jax.random.uniform(key, shape, jnp.float32, -bound, bound)


def init_params(key):
    keys = iter(jax.random.split(key, 16))
    params = {
        # embedding tables
        "user_id_emb": xavier_uniform(next(keys), (USER_VOCAB, D_ID)),
        "item_id_emb": xavier_uniform(next(keys), (ITEM_VOCAB, D_ID)),
        "user_feat_embs": [
            xavier_uniform(next(keys), (v, D_FEAT)) for v in USER_FEATURE_VOCABS.values()
        ],
        "item_feat_embs": [
            xavier_uniform(next(keys), (v, D_FEAT)) for v in ITEM_FEATURE_VOCABS.values()
        ],
        # user MLP: Linear(40 -> 20) / ReLU / Dropout / Linear(20 -> 32)
        "user_w1": xavier_uniform(next(keys), (USER_TOTAL, USER_HIDDEN)),
        "user_b1": jnp.zeros((1, USER_HIDDEN), jnp.float32),
        "user_w2": xavier_uniform(next(keys), (USER_HIDDEN, D_OUT)),
        "user_b2": jnp.zeros((1, D_OUT), jnp.float32),
        # item MLP: Linear(32 -> 16) / ReLU / Dropout / Linear(16 -> 32)
        "item_w1": xavier_uniform(next(keys), (ITEM_TOTAL, ITEM_HIDDEN)),
        "item_b1": jnp.zeros((1, ITEM_HIDDEN), jnp.float32),
        "item_w2": xavier_uniform(next(keys), (ITEM_HIDDEN, D_OUT)),
        "item_b2": jnp.zeros((1, D_OUT), jnp.float32),
    }
    return params


# ------------------- placement-only fused / padded weights -------------------
def build_fused_params(params):
    """Block-place (no FP math) all tables/weights into padded, fused, transposed
    matrices so the kernel runs one lane-dense MXU matmul per layer."""
    tables = ([params["user_id_emb"]] + list(params["user_feat_embs"])
              + [params["item_id_emb"]] + list(params["item_feat_embs"]))

    # combined embedding table: row block per feature vocab, column block per
    # feature's slice of the concatenated [user_cat | item_cat] vector.
    e_comb = jnp.zeros((V_PAD, E_PAD), jnp.float32)
    r = c = 0
    for tbl in tables:
        v, d = tbl.shape
        e_comb = e_comb.at[r:r + v, c:c + d].set(tbl)
        r += v
        c += d

    # block-diagonal layer-1: [72 -> 36], padded to [128, 128]
    w1 = jnp.zeros((E_PAD, H_PAD), jnp.float32)
    w1 = w1.at[:USER_TOTAL, :USER_HIDDEN].set(params["user_w1"])
    w1 = w1.at[USER_TOTAL:E_TOTAL, USER_HIDDEN:H_TOTAL].set(params["item_w1"])
    b1 = jnp.zeros((H_PAD, 1), jnp.float32)
    b1 = b1.at[:USER_HIDDEN, 0].set(params["user_b1"][0])
    b1 = b1.at[USER_HIDDEN:H_TOTAL, 0].set(params["item_b1"][0])

    # block-diagonal layer-2: [36 -> 64], padded to [128, 128]
    w2 = jnp.zeros((H_PAD, O_PAD), jnp.float32)
    w2 = w2.at[:USER_HIDDEN, :D_OUT].set(params["user_w2"])
    w2 = w2.at[USER_HIDDEN:H_TOTAL, D_OUT:O_TOTAL].set(params["item_w2"])
    b2 = jnp.zeros((O_PAD, 1), jnp.float32)
    b2 = b2.at[:D_OUT, 0].set(params["user_b2"][0])
    b2 = b2.at[D_OUT:O_TOTAL, 0].set(params["item_b2"][0])

    # kernel works transposed (features on sublanes, batch on lanes)
    return {"e_t": e_comb.T, "w1_t": w1.T, "b1": b1, "w2_t": w2.T, "b2": b2}


# ----------------------------- Pallas kernel --------------------------------
def _two_tower_kernel(idx_ref, et_ref, w1t_ref, b1_ref, w2t_ref, b2_ref, out_ref):
    tb = out_ref.shape[-1]                                   # batch tile (lanes)

    # multi-hot over the combined (offset) vocabulary, batch on lanes
    iota_v = lax.broadcasted_iota(jnp.int32, (V_PAD, tb), 0)
    mh = jnp.zeros((V_PAD, tb), jnp.float32)
    for c in range(NUM_FEATS):                               # static unroll (7)
        row = idx_ref[pl.ds(c, 1), :]                        # [1, tb] int32
        mh = mh + (iota_v == row).astype(jnp.float32)

    # fused embedding gather + concat as one MXU matmul: [E_PAD, tb]
    x_t = jnp.dot(et_ref[...], mh, preferred_element_type=jnp.float32)

    # fused (block-diagonal) layer-1 of both towers, bias + ReLU
    h_t = jnp.dot(w1t_ref[...], x_t, preferred_element_type=jnp.float32) + b1_ref[...]
    h_t = jnp.maximum(h_t, 0.0)                              # Dropout(0.3) = identity (eval)

    # fused layer-2 -> rows 0:32 = user_repr, rows 32:64 = item_repr
    o_t = jnp.dot(w2t_ref[...], h_t, preferred_element_type=jnp.float32) + b2_ref[...]
    ur = o_t[0:D_OUT, :]                                     # [32, tb]
    ir = o_t[D_OUT:2 * D_OUT, :]                             # [32, tb]

    # dot-product score; lane-dense (1, tb) output block
    out_ref[...] = jnp.sum(ur * ir, axis=0, keepdims=True)


def two_tower_pallas(user_idx, item_idx, fused, *, block_b=1024):
    """user_idx: int32 [B, 4], item_idx: int32 [B, 3] -> scores f32 [B]."""
    B = user_idx.shape[0]
    tb = min(block_b, _round_up(B, 128))          # lane-aligned batch tile
    b_pad = _round_up(B, tb)

    user_off = jnp.asarray(VOCAB_OFFSETS[:len(USER_VOCABS)], jnp.int32)
    item_off = jnp.asarray(VOCAB_OFFSETS[len(USER_VOCABS):], jnp.int32)
    idx_all = jnp.concatenate(
        [user_idx.astype(jnp.int32) + user_off[None, :],
         item_idx.astype(jnp.int32) + item_off[None, :]], axis=1)       # [B, 7]
    idx_t = jnp.pad(idx_all.T, ((0, 0), (0, b_pad - B)))                # [7, b_pad]

    grid = (b_pad // tb,)
    out = pl.pallas_call(
        _two_tower_kernel,
        out_shape=jax.ShapeDtypeStruct((1, b_pad), jnp.float32),
        grid=grid,
        in_specs=[
            pl.BlockSpec((NUM_FEATS, tb), lambda i: (0, i)),   # per-tile ids (28 B/row)
            pl.BlockSpec((E_PAD, V_PAD), lambda i: (0, 0)),    # resident weights
            pl.BlockSpec((H_PAD, E_PAD), lambda i: (0, 0)),
            pl.BlockSpec((H_PAD, 1), lambda i: (0, 0)),
            pl.BlockSpec((O_PAD, H_PAD), lambda i: (0, 0)),
            pl.BlockSpec((O_PAD, 1), lambda i: (0, 0)),
        ],
        out_specs=pl.BlockSpec((1, tb), lambda i: (0, i)),     # lane-dense scores
        compiler_params=pltpu.CompilerParams(
            dimension_semantics=("parallel",)),                # megacore on v7x
    )(idx_t, fused["e_t"], fused["w1_t"], fused["b1"], fused["w2_t"], fused["b2"])
    return out[0, :B]


# ------------------------- forward (glue + kernel) ---------------------------
def forward(params, user_features_batch, item_features_batch, block_b=1024):
    # In production build_fused_params would be computed once (it is pure
    # placement of the original parameters) and cached.
    fused = build_fused_params(params)
    return two_tower_pallas(user_features_batch, item_features_batch, fused,
                            block_b=block_b)


# ------------------------------- reference ----------------------------------
def forward_ref(params, user_features_batch, item_features_batch):
    u_embs = [jnp.take(params["user_id_emb"], user_features_batch[:, 0], axis=0)]
    for i, tbl in enumerate(params["user_feat_embs"]):
        u_embs.append(jnp.take(tbl, user_features_batch[:, i + 1], axis=0))
    u = jnp.concatenate(u_embs, axis=1)
    u = jnp.maximum(u @ params["user_w1"] + params["user_b1"], 0.0)
    ur = u @ params["user_w2"] + params["user_b2"]

    i_embs = [jnp.take(params["item_id_emb"], item_features_batch[:, 0], axis=0)]
    for i, tbl in enumerate(params["item_feat_embs"]):
        i_embs.append(jnp.take(tbl, item_features_batch[:, i + 1], axis=0))
    it = jnp.concatenate(i_embs, axis=1)
    it = jnp.maximum(it @ params["item_w1"] + params["item_b1"], 0.0)
    ir = it @ params["item_w2"] + params["item_b2"]
    return jnp.sum(ur * ir, axis=1)


# --------------------------------- main --------------------------------------
if __name__ == "__main__":
    key = jax.random.PRNGKey(0)
    pkey, ukey, ikey = jax.random.split(key, 3)
    params = init_params(pkey)

    def make_batch(uk, ik, B):
        user_keys = jax.random.split(uk, len(USER_VOCABS))
        item_keys = jax.random.split(ik, len(ITEM_VOCABS))
        ub = jnp.stack([jax.random.randint(k, (B,), 0, v, jnp.int32)
                        for k, v in zip(user_keys, USER_VOCABS)], axis=1)   # [B, 4]
        ib = jnp.stack([jax.random.randint(k, (B,), 0, v, jnp.int32)
                        for k, v in zip(item_keys, ITEM_VOCABS)], axis=1)   # [B, 3]
        return ub, ib

    # small single-tile check (B=8, padded to one 128-row tile)
    u8, i8 = make_batch(ukey, ikey, 8)
    s8 = jax.block_until_ready(forward(params, u8, i8))
    r8 = forward_ref(params, u8, i8)
    assert s8.shape == (8,)
    assert jnp.allclose(s8, r8, atol=5e-5, rtol=5e-5), (s8, r8)

    # multi-tile check: grid of 3 batch tiles with a padded tail
    k2, k3 = jax.random.split(jax.random.PRNGKey(1))
    u260, i260 = make_batch(k2, k3, 260)
    s260 = jax.block_until_ready(forward(params, u260, i260, block_b=128))
    r260 = forward_ref(params, u260, i260)
    assert s260.shape == (260,)
    assert jnp.allclose(s260, r260, atol=5e-5, rtol=5e-5)

    print("KERNEL_OK")
</pallas_src>

<mosaic_0001>
module attributes {stable_mosaic.version = 11 : i64} {
  func.func @_two_tower_kernel(%arg0: i32, %arg1: memref<7x128xi32, #tpu.memory_space<vmem>>, %arg2: memref<128x256xf32, #tpu.memory_space<vmem>>, %arg3: memref<128x128xf32, #tpu.memory_space<vmem>>, %arg4: memref<128x1xf32, #tpu.memory_space<vmem>>, %arg5: memref<128x128xf32, #tpu.memory_space<vmem>>, %arg6: memref<128x1xf32, #tpu.memory_space<vmem>>, %arg7: memref<1x128xf32, #tpu.memory_space<vmem>>) attributes {dimension_semantics = [#tpu.dimension_semantics<parallel>], iteration_bounds = array<i64: 1>, scalar_prefetch = 0 : i64, scratch_operands = 0 : i64, tpu.core_type = #tpu.core_type<tc>, window_params = [{transform_indices = @transform_0, window_bounds = array<i64: 7, 128>}, {pipeline_mode = #tpu.pipeline_mode<synchronous>, transform_indices = @transform_1, window_bounds = array<i64: 128, 256>}, {pipeline_mode = #tpu.pipeline_mode<synchronous>, transform_indices = @transform_2, window_bounds = array<i64: 128, 128>}, {pipeline_mode = #tpu.pipeline_mode<synchronous>, transform_indices = @transform_3, window_bounds = array<i64: 128, 1>}, {pipeline_mode = #tpu.pipeline_mode<synchronous>, transform_indices = @transform_4, window_bounds = array<i64: 128, 128>}, {pipeline_mode = #tpu.pipeline_mode<synchronous>, transform_indices = @transform_5, window_bounds = array<i64: 128, 1>}, {transform_indices = @transform_6, window_bounds = array<i64: 1, 128>}]} {
    %0 = tpu.iota {dimensions = array<i32: 0>} : vector<256x128xi32>
    %cst = arith.constant 0.000000e+00 : f32
    %1 = vector.broadcast %cst : f32 to vector<256x128xf32>
    %c0 = arith.constant 0 : index
    %c0_0 = arith.constant 0 : index
    %2 = vector.load %arg1[%c0, %c0_0] : memref<7x128xi32, #tpu.memory_space<vmem>>, vector<1x128xi32>
    %3 = vector.broadcast %2 : vector<1x128xi32> to vector<256x128xi32>
    %4 = arith.cmpi eq, %0, %3 : vector<256x128xi32>
    %5 = arith.extui %4 : vector<256x128xi1> to vector<256x128xi32>
    %6 = arith.sitofp %5 : vector<256x128xi32> to vector<256x128xf32>
    %7 = arith.addf %1, %6 : vector<256x128xf32>
    %c1 = arith.constant 1 : index
    %c0_1 = arith.constant 0 : index
    %8 = vector.load %arg1[%c1, %c0_1] : memref<7x128xi32, #tpu.memory_space<vmem>>, vector<1x128xi32>
    %9 = vector.broadcast %8 : vector<1x128xi32> to vector<256x128xi32>
    %10 = arith.cmpi eq, %0, %9 : vector<256x128xi32>
    %11 = arith.extui %10 : vector<256x128xi1> to vector<256x128xi32>
    %12 = arith.sitofp %11 : vector<256x128xi32> to vector<256x128xf32>
    %13 = arith.addf %7, %12 : vector<256x128xf32>
    %c2 = arith.constant 2 : index
    %c0_2 = arith.constant 0 : index
    %14 = vector.load %arg1[%c2, %c0_2] : memref<7x128xi32, #tpu.memory_space<vmem>>, vector<1x128xi32>
    %15 = vector.broadcast %14 : vector<1x128xi32> to vector<256x128xi32>
    %16 = arith.cmpi eq, %0, %15 : vector<256x128xi32>
    %17 = arith.extui %16 : vector<256x128xi1> to vector<256x128xi32>
    %18 = arith.sitofp %17 : vector<256x128xi32> to vector<256x128xf32>
    %19 = arith.addf %13, %18 : vector<256x128xf32>
    %c3 = arith.constant 3 : index
    %c0_3 = arith.constant 0 : index
    %20 = vector.load %arg1[%c3, %c0_3] : memref<7x128xi32, #tpu.memory_space<vmem>>, vector<1x128xi32>
    %21 = vector.broadcast %20 : vector<1x128xi32> to vector<256x128xi32>
    %22 = arith.cmpi eq, %0, %21 : vector<256x128xi32>
    %23 = arith.extui %22 : vector<256x128xi1> to vector<256x128xi32>
    %24 = arith.sitofp %23 : vector<256x128xi32> to vector<256x128xf32>
    %25 = arith.addf %19, %24 : vector<256x128xf32>
    %c4 = arith.constant 4 : index
    %c0_4 = arith.constant 0 : index
    %26 = vector.load %arg1[%c4, %c0_4] : memref<7x128xi32, #tpu.memory_space<vmem>>, vector<1x128xi32>
    %27 = vector.broadcast %26 : vector<1x128xi32> to vector<256x128xi32>
    %28 = arith.cmpi eq, %0, %27 : vector<256x128xi32>
    %29 = arith.extui %28 : vector<256x128xi1> to vector<256x128xi32>
    %30 = arith.sitofp %29 : vector<256x128xi32> to vector<256x128xf32>
    %31 = arith.addf %25, %30 : vector<256x128xf32>
    %c5 = arith.constant 5 : index
    %c0_5 = arith.constant 0 : index
    %32 = vector.load %arg1[%c5, %c0_5] : memref<7x128xi32, #tpu.memory_space<vmem>>, vector<1x128xi32>
    %33 = vector.broadcast %32 : vector<1x128xi32> to vector<256x128xi32>
    %34 = arith.cmpi eq, %0, %33 : vector<256x128xi32>
    %35 = arith.extui %34 : vector<256x128xi1> to vector<256x128xi32>
    %36 = arith.sitofp %35 : vector<256x128xi32> to vector<256x128xf32>
    %37 = arith.addf %31, %36 : vector<256x128xf32>
    %c6 = arith.constant 6 : index
    %c0_6 = arith.constant 0 : index
    %38 = vector.load %arg1[%c6, %c0_6] : memref<7x128xi32, #tpu.memory_space<vmem>>, vector<1x128xi32>
    %39 = vector.broadcast %38 : vector<1x128xi32> to vector<256x128xi32>
    %40 = arith.cmpi eq, %0, %39 : vector<256x128xi32>
    %41 = arith.extui %40 : vector<256x128xi1> to vector<256x128xi32>
    %42 = arith.sitofp %41 : vector<256x128xi32> to vector<256x128xf32>
    %43 = arith.addf %37, %42 : vector<256x128xf32>
    %c0_7 = arith.constant 0 : index
    %c0_8 = arith.constant 0 : index
    %44 = vector.load %arg2[%c0_7, %c0_8] : memref<128x256xf32, #tpu.memory_space<vmem>>, vector<128x256xf32>
    %cst_9 = arith.constant dense<0.000000e+00> : vector<128x128xf32>
    %45 = tpu.matmul %44, %43, %cst_9 {dimension_numbers = #tpu.dot_dimension_numbers<[1], [0], [0], [1], [0, 0, 1, 1], [], []>} : vector<128x256xf32>, vector<256x128xf32>, vector<128x128xf32> -> vector<128x128xf32>
    %c0_10 = arith.constant 0 : index
    %c0_11 = arith.constant 0 : index
    %46 = vector.load %arg3[%c0_10, %c0_11] : memref<128x128xf32, #tpu.memory_space<vmem>>, vector<128x128xf32>
    %cst_12 = arith.constant dense<0.000000e+00> : vector<128x128xf32>
    %47 = tpu.matmul %46, %45, %cst_12 {dimension_numbers = #tpu.dot_dimension_numbers<[1], [0], [0], [1], [0, 0, 1, 1], [], []>} : vector<128x128xf32>, vector<128x128xf32>, vector<128x128xf32> -> vector<128x128xf32>
    %c0_13 = arith.constant 0 : index
    %c0_14 = arith.constant 0 : index
    %48 = vector.load %arg4[%c0_13, %c0_14] : memref<128x1xf32, #tpu.memory_space<vmem>>, vector<128x1xf32>
    %49 = vector.broadcast %48 : vector<128x1xf32> to vector<128x128xf32>
    %50 = arith.addf %47, %49 : vector<128x128xf32>
    %cst_15 = arith.constant 0.000000e+00 : f32
    %51 = vector.broadcast %cst_15 : f32 to vector<128x128xf32>
    %52 = arith.maximumf %50, %51 : vector<128x128xf32>
    %c0_16 = arith.constant 0 : index
    %c0_17 = arith.constant 0 : index
    %53 = vector.load %arg5[%c0_16, %c0_17] : memref<128x128xf32, #tpu.memory_space<vmem>>, vector<128x128xf32>
    %cst_18 = arith.constant dense<0.000000e+00> : vector<128x128xf32>
    %54 = tpu.matmul %53, %52, %cst_18 {dimension_numbers = #tpu.dot_dimension_numbers<[1], [0], [0], [1], [0, 0, 1, 1], [], []>} : vector<128x128xf32>, vector<128x128xf32>, vector<128x128xf32> -> vector<128x128xf32>
    %c0_19 = arith.constant 0 : index
    %c0_20 = arith.constant 0 : index
    %55 = vector.load %arg6[%c0_19, %c0_20] : memref<128x1xf32, #tpu.memory_space<vmem>>, vector<128x1xf32>
    %56 = vector.broadcast %55 : vector<128x1xf32> to vector<128x128xf32>
    %57 = arith.addf %54, %56 : vector<128x128xf32>
    %58 = vector.extract_strided_slice %57 {offsets = [0, 0], sizes = [32, 128], strides = [1, 1]} : vector<128x128xf32> to vector<32x128xf32>
    %59 = vector.extract_strided_slice %57 {offsets = [32, 0], sizes = [32, 128], strides = [1, 1]} : vector<128x128xf32> to vector<32x128xf32>
    %60 = arith.mulf %58, %59 : vector<32x128xf32>
    %cst_21 = arith.constant dense<0.000000e+00> : vector<128xf32>
    %61 = vector.multi_reduction <add>, %60, %cst_21 [0] : vector<32x128xf32> to vector<128xf32>
    %62 = vector.shape_cast %61 : vector<128xf32> to vector<1x128xf32>
    %c0_22 = arith.constant 0 : index
    %c0_23 = arith.constant 0 : index
    %63 = vector.load %arg7[%c0_22, %c0_23] : memref<1x128xf32, #tpu.memory_space<vmem>>, vector<1x128xf32>
    tpu.vector_store %arg7[%c0_22, %c0_23], %62 {strides = array<i32>} : memref<1x128xf32, #tpu.memory_space<vmem>>, vector<1x128xf32>,
    return
  }
  func.func @transform_0(%arg0: i32) -> (i32, i32) {
    %c0_i32 = arith.constant 0 : i32
    %c0_i32_0 = arith.constant 0 : i32
    return %c0_i32, %arg0 : i32, i32
  }
  func.func @transform_1(%arg0: i32) -> (i32, i32) {
    %c0_i32 = arith.constant 0 : i32
    %c0_i32_0 = arith.constant 0 : i32
    %c0_i32_1 = arith.constant 0 : i32
    return %c0_i32, %c0_i32_0 : i32, i32
  }
  func.func @transform_2(%arg0: i32) -> (i32, i32) {
    %c0_i32 = arith.constant 0 : i32
    %c0_i32_0 = arith.constant 0 : i32
    %c0_i32_1 = arith.constant 0 : i32
    return %c0_i32, %c0_i32_0 : i32, i32
  }
  func.func @transform_3(%arg0: i32) -> (i32, i32) {
    %c0_i32 = arith.constant 0 : i32
    %c0_i32_0 = arith.constant 0 : i32
    %c0_i32_1 = arith.constant 0 : i32
    return %c0_i32, %c0_i32_0 : i32, i32
  }
  func.func @transform_4(%arg0: i32) -> (i32, i32) {
    %c0_i32 = arith.constant 0 : i32
    %c0_i32_0 = arith.constant 0 : i32
    %c0_i32_1 = arith.constant 0 : i32
    return %c0_i32, %c0_i32_0 : i32, i32
  }
  func.func @transform_5(%arg0: i32) -> (i32, i32) {
    %c0_i32 = arith.constant 0 : i32
    %c0_i32_0 = arith.constant 0 : i32
    %c0_i32_1 = arith.constant 0 : i32
    return %c0_i32, %c0_i32_0 : i32, i32
  }
  func.func @transform_6(%arg0: i32) -> (i32, i32) {
    %c0_i32 = arith.constant 0 : i32
    %c0_i32_0 = arith.constant 0 : i32
    return %c0_i32, %arg0 : i32, i32
  }
}

</mosaic_0001>

<llo_original>
// kernel: tpu_custom_call.1
$region0: #{tpu_custom_call.1}
  #allocation0 [shape = 'u32[]', space=smem, size = 0x4, offset = 0x4, fixed_abs, tag = 'smem constant byte address 0x4 - core index']
  #allocation1 [shape = 'u32[144,128]{1,0:T(1,128)}', space=vmem, size = 0x12000, scoped, tag = 'internal scratch']
  %s0 = inlined_call_operand.hbm [shape: s32[7,128], index: 0, kind: input, shape index: {}]
  %s1 = inlined_call_operand.vmem [shape: f32[128,256], index: 1, kind: input, shape index: {}]
  %s2 = inlined_call_operand.hbm [shape: f32[128,128], index: 2, kind: input, shape index: {}]
  %s3 = inlined_call_operand.vmem [shape: f32[128,1], index: 3, kind: input, shape index: {}]
  %s4 = inlined_call_operand.hbm [shape: f32[128,128], index: 4, kind: input, shape index: {}]
  %s5 = inlined_call_operand.vmem [shape: f32[128,1], index: 5, kind: input, shape index: {}]
  %s6 = inlined_call_operand.hbm [shape: f32[1,128], index: 6, kind: output, shape index: {}]
  %s7 = sld [smem:[#allocation0]]
  $region46: #{tpu_custom_call.1} parent=0
    _
  %s9 = ssub.s32 1, %s7
  %s10 = scalar_select 0, %s9, %s7
  $region1: #{tpu_custom_call.1} parent=0
    #allocation2 [shape = 'u8[4096]{0}', space=vmem, size = 0x1000, scoped, tag = 'input window, operand 0, single buffered']
    #allocation3 [shape = 's32[1]{0}', space=sflag, size = 0x4, scoped, tag = 'scoped memory for tpu_custom_call.1']
    #allocation4 [shape = 's32[1]{0}', space=sflag, size = 0x4, scoped, tag = 'scoped memory for tpu_custom_call.1']
    #allocation5 [shape = 'u8[65536]{0}', space=vmem, size = 0x10000, scoped, tag = 'input window, operand 2, single buffered']
    #allocation6 [shape = 's32[1]{0}', space=sflag, size = 0x4, scoped, tag = 'scoped memory for tpu_custom_call.1']
    #allocation7 [shape = 'u8[65536]{0}', space=vmem, size = 0x10000, scoped, tag = 'input window, operand 4, single buffered']
    #allocation8 [shape = 'u8[512]{0}', space=vmem, size = 0x400, scoped, tag = 'output window, operand 0, single buffered']
    %11 = vsyncpa [#allocation3], 0
    %12 = vsyncpa [#allocation6], 0
    %13 = vsyncpa [#allocation4], 0
    // Predicated region
    $region2: #{tpu_custom_call.1} parent=1 // pred_check
      _
    $region3: #{tpu_custom_call.1} parent=1 // pred_check_branch
      %15 = sbr.rel (0) target = $region5
    $region4: #{tpu_custom_call.1} parent=1 // pred_region
      %s17 = ssub.s32 128, 128
      %18 = vsyncadd [#allocation3], %s17
      %s20 = sshll.u32 [#allocation2], 4
      %s21 = int_to_ptr.vmem [resolvable:$true] %s20
      %23 = dma.hbm_to_vmem [thread:$0]  %s0, 128, %s21, [#allocation3]
    $region5: #{tpu_custom_call.1} parent=1 // pred_fallthru
      _
    // Predicated region
    $region6: #{tpu_custom_call.1} parent=1 // pred_check
      _
    $region7: #{tpu_custom_call.1} parent=1 // pred_check_branch
      %25 = sbr.rel (0) target = $region9
    $region8: #{tpu_custom_call.1} parent=1 // pred_region
      _
    $region9: #{tpu_custom_call.1} parent=1 // pred_fallthru
      _
    // Predicated region
    $region10: #{tpu_custom_call.1} parent=1 // pred_check
      _
    $region11: #{tpu_custom_call.1} parent=1 // pred_check_branch
      %27 = sbr.rel (0) target = $region13
    $region12: #{tpu_custom_call.1} parent=1 // pred_region
      %s29 = ssub.s32 2048, 2048
      %30 = vsyncadd [#allocation6], %s29
      %s31 = sshll.u32 [#allocation5], 4
      %s32 = int_to_ptr.vmem [resolvable:$true] %s31
      %37 = dma.hbm_to_vmem [thread:$0]  %s2, 2048, %s32, [#allocation6], 128, 128, 8
    $region13: #{tpu_custom_call.1} parent=1 // pred_fallthru
      _
    // Predicated region
    $region14: #{tpu_custom_call.1} parent=1 // pred_check
      _
    $region15: #{tpu_custom_call.1} parent=1 // pred_check_branch
      %39 = sbr.rel (0) target = $region17
    $region16: #{tpu_custom_call.1} parent=1 // pred_region
      _
    $region17: #{tpu_custom_call.1} parent=1 // pred_fallthru
      _
    // Predicated region
    $region18: #{tpu_custom_call.1} parent=1 // pred_check
      _
    $region19: #{tpu_custom_call.1} parent=1 // pred_check_branch
      %41 = sbr.rel (0) target = $region21
    $region20: #{tpu_custom_call.1} parent=1 // pred_region
      %s43 = ssub.s32 2048, 2048
      %44 = vsyncadd [#allocation6], %s43
      %s45 = sshll.u32 [#allocation7], 4
      %s46 = int_to_ptr.vmem [resolvable:$true] %s45
      %51 = dma.hbm_to_vmem [thread:$0]  %s4, 2048, %s46, [#allocation6], 128, 128, 8
    $region21: #{tpu_custom_call.1} parent=1 // pred_fallthru
      _
    // Predicated region
    $region22: #{tpu_custom_call.1} parent=1 // pred_check
      _
    $region23: #{tpu_custom_call.1} parent=1 // pred_check_branch
      %53 = sbr.rel (0) target = $region25
    $region24: #{tpu_custom_call.1} parent=1 // pred_region
      _
    $region25: #{tpu_custom_call.1} parent=1 // pred_fallthru
      _
    // Predicated region
    $region26: #{tpu_custom_call.1} parent=1 // pred_check
      _
    $region27: #{tpu_custom_call.1} parent=1 // pred_check_branch
      %55 = sbr.rel (0) target = $region29
    $region28: #{tpu_custom_call.1} parent=1 // pred_region
      %56 = dma.done [#allocation3], 128
    $region29: #{tpu_custom_call.1} parent=1 // pred_fallthru
      _
    // Predicated region
    $region30: #{tpu_custom_call.1} parent=1 // pred_check
      _
    $region31: #{tpu_custom_call.1} parent=1 // pred_check_branch
      %58 = sbr.rel (0) target = $region33
    $region32: #{tpu_custom_call.1} parent=1 // pred_region
      %59 = dma.done [#allocation6], 2048
    $region33: #{tpu_custom_call.1} parent=1 // pred_fallthru
      _
    // Predicated region
    $region34: #{tpu_custom_call.1} parent=1 // pred_check
      _
    $region35: #{tpu_custom_call.1} parent=1 // pred_check_branch
      %61 = sbr.rel (0) target = $region37
    $region36: #{tpu_custom_call.1} parent=1 // pred_region
      %62 = dma.done [#allocation6], 2048
    $region37: #{tpu_custom_call.1} parent=1 // pred_fallthru
      _
    %v63 = vlaneseq
    %v64 = vshrl.u32 %v63, 7
    %v65 = vadd.s32 %v64, 8
    %v66 = vadd.s32 %v64, 16
    %v67 = vadd.s32 %v64, 24
    %v68 = vadd.s32 %v64, 32
    %v69 = vadd.s32 %v64, 40
    %v70 = vadd.s32 %v64, 48
    %v71 = vadd.s32 %v64, 56
    %v72 = vadd.s32 %v64, 64
    %v73 = vadd.s32 %v64, 72
    %v74 = vadd.s32 %v64, 80
    %v75 = vadd.s32 %v64, 88
    %v76 = vadd.s32 %v64, 96
    %v77 = vadd.s32 %v64, 104
    %v78 = vadd.s32 %v64, 112
    %v79 = vadd.s32 %v64, 120
    %v80 = vadd.s32 %v64, 128
    %v81 = vadd.s32 %v64, 136
    %v82 = vadd.s32 %v64, 144
    %v83 = vadd.s32 %v64, 152
    %v84 = vadd.s32 %v64, 160
    %v85 = vadd.s32 %v64, 168
    %v86 = vadd.s32 %v64, 176
    %v87 = vadd.s32 %v64, 184
    %v88 = vadd.s32 %v64, 192
    %v89 = vadd.s32 %v64, 200
    %v90 = vadd.s32 %v64, 208
    %v91 = vadd.s32 %v64, 216
    %v92 = vadd.s32 %v64, 224
    %v93 = vadd.s32 %v64, 232
    %v94 = vadd.s32 %v64, 240
    %v95 = vadd.s32 %v64, 248
    %v96 = vld [vmem:[#allocation2] sm:$0x1]
    %v97 = vlaneseq
    %v98 = vshrl.u32 %v97, 7
    %v99 = vsub.s32 0, %v98
    %v100 = vrot.slane %v96, %v99
    %vm101 = vcmp.eq.s32.totalorder %v64, %v100
    %vm102 = vcmp.eq.s32.totalorder %v65, %v100
    %vm103 = vcmp.eq.s32.totalorder %v66, %v100
    %vm104 = vcmp.eq.s32.totalorder %v67, %v100
    %vm105 = vcmp.eq.s32.totalorder %v68, %v100
    %vm106 = vcmp.eq.s32.totalorder %v69, %v100
    %vm107 = vcmp.eq.s32.totalorder %v70, %v100
    %vm108 = vcmp.eq.s32.totalorder %v71, %v100
    %vm109 = vcmp.eq.s32.totalorder %v72, %v100
    %vm110 = vcmp.eq.s32.totalorder %v73, %v100
    %vm111 = vcmp.eq.s32.totalorder %v74, %v100
    %vm112 = vcmp.eq.s32.totalorder %v75, %v100
    %vm113 = vcmp.eq.s32.totalorder %v76, %v100
    %vm114 = vcmp.eq.s32.totalorder %v77, %v100
    %vm115 = vcmp.eq.s32.totalorder %v78, %v100
    %vm116 = vcmp.eq.s32.totalorder %v79, %v100
    %vm117 = vcmp.eq.s32.totalorder %v80, %v100
    %vm118 = vcmp.eq.s32.totalorder %v81, %v100
    %vm119 = vcmp.eq.s32.totalorder %v82, %v100
    %vm120 = vcmp.eq.s32.totalorder %v83, %v100
    %vm121 = vcmp.eq.s32.totalorder %v84, %v100
    %vm122 = vcmp.eq.s32.totalorder %v85, %v100
    %vm123 = vcmp.eq.s32.totalorder %v86, %v100
    %vm124 = vcmp.eq.s32.totalorder %v87, %v100
    %vm125 = vcmp.eq.s32.totalorder %v88, %v100
    %vm126 = vcmp.eq.s32.totalorder %v89, %v100
    %vm127 = vcmp.eq.s32.totalorder %v90, %v100
    %vm128 = vcmp.eq.s32.totalorder %v91, %v100
    %vm129 = vcmp.eq.s32.totalorder %v92, %v100
    %vm130 = vcmp.eq.s32.totalorder %v93, %v100
    %vm131 = vcmp.eq.s32.totalorder %v94, %v100
    %vm132 = vcmp.eq.s32.totalorder %v95, %v100
    %v133 = vsel %vm101, 1, 0
    %v134 = vsel %vm102, 1, 0
    %v135 = vsel %vm103, 1, 0
    %v136 = vsel %vm104, 1, 0
    %v137 = vsel %vm105, 1, 0
    %v138 = vsel %vm106, 1, 0
    %v139 = vsel %vm107, 1, 0
    %v140 = vsel %vm108, 1, 0
    %v141 = vsel %vm109, 1, 0
    %v142 = vsel %vm110, 1, 0
    %v143 = vsel %vm111, 1, 0
    %v144 = vsel %vm112, 1, 0
    %v145 = vsel %vm113, 1, 0
    %v146 = vsel %vm114, 1, 0
    %v147 = vsel %vm115, 1, 0
    %v148 = vsel %vm116, 1, 0
    %v149 = vsel %vm117, 1, 0
    %v150 = vsel %vm118, 1, 0
    %v151 = vsel %vm119, 1, 0
    %v152 = vsel %vm120, 1, 0
    %v153 = vsel %vm121, 1, 0
    %v154 = vsel %vm122, 1, 0
    %v155 = vsel %vm123, 1, 0
    %v156 = vsel %vm124, 1, 0
    %v157 = vsel %vm125, 1, 0
    %v158 = vsel %vm126, 1, 0
    %v159 = vsel %vm127, 1, 0
    %v160 = vsel %vm128, 1, 0
    %v161 = vsel %vm129, 1, 0
    %v162 = vsel %vm130, 1, 0
    %v163 = vsel %vm131, 1, 0
    %v164 = vsel %vm132, 1, 0
    %v165 = vcvt.s32.f32 %v133
    %v166 = vcvt.s32.f32 %v134
    %v167 = vcvt.s32.f32 %v135
    %v168 = vcvt.s32.f32 %v136
    %v169 = vcvt.s32.f32 %v137
    %v170 = vcvt.s32.f32 %v138
    %v171 = vcvt.s32.f32 %v139
    %v172 = vcvt.s32.f32 %v140
    %v173 = vcvt.s32.f32 %v141
    %v174 = vcvt.s32.f32 %v142
    %v175 = vcvt.s32.f32 %v143
    %v176 = vcvt.s32.f32 %v144
    %v177 = vcvt.s32.f32 %v145
    %v178 = vcvt.s32.f32 %v146
    %v179 = vcvt.s32.f32 %v147
    %v180 = vcvt.s32.f32 %v148
    %v181 = vcvt.s32.f32 %v149
    %v182 = vcvt.s32.f32 %v150
    %v183 = vcvt.s32.f32 %v151
    %v184 = vcvt.s32.f32 %v152
    %v185 = vcvt.s32.f32 %v153
    %v186 = vcvt.s32.f32 %v154
    %v187 = vcvt.s32.f32 %v155
    %v188 = vcvt.s32.f32 %v156
    %v189 = vcvt.s32.f32 %v157
    %v190 = vcvt.s32.f32 %v158
    %v191 = vcvt.s32.f32 %v159
    %v192 = vcvt.s32.f32 %v160
    %v193 = vcvt.s32.f32 %v161
    %v194 = vcvt.s32.f32 %v162
    %v195 = vcvt.s32.f32 %v163
    %v196 = vcvt.s32.f32 %v164
    %v197 = vadd.f32 %v165, 0.0
    %v198 = vadd.f32 %v166, 0.0
    %v199 = vadd.f32 %v167, 0.0
    %v200 = vadd.f32 %v168, 0.0
    %v201 = vadd.f32 %v169, 0.0
    %v202 = vadd.f32 %v170, 0.0
    %v203 = vadd.f32 %v171, 0.0
    %v204 = vadd.f32 %v172, 0.0
    %v205 = vadd.f32 %v173, 0.0
    %v206 = vadd.f32 %v174, 0.0
    %v207 = vadd.f32 %v175, 0.0
    %v208 = vadd.f32 %v176, 0.0
    %v209 = vadd.f32 %v177, 0.0
    %v210 = vadd.f32 %v178, 0.0
    %v211 = vadd.f32 %v179, 0.0
    %v212 = vadd.f32 %v180, 0.0
    %v213 = vadd.f32 %v181, 0.0
    %v214 = vadd.f32 %v182, 0.0
    %v215 = vadd.f32 %v183, 0.0
    %v216 = vadd.f32 %v184, 0.0
    %v217 = vadd.f32 %v185, 0.0
    %v218 = vadd.f32 %v186, 0.0
    %v219 = vadd.f32 %v187, 0.0
    %v220 = vadd.f32 %v188, 0.0
    %v221 = vadd.f32 %v189, 0.0
    %v222 = vadd.f32 %v190, 0.0
    %v223 = vadd.f32 %v191, 0.0
    %v224 = vadd.f32 %v192, 0.0
    %v225 = vadd.f32 %v193, 0.0
    %v226 = vadd.f32 %v194, 0.0
    %v227 = vadd.f32 %v195, 0.0
    %v228 = vadd.f32 %v196, 0.0
    %v229 = vld [vmem:[#allocation2 + $0x1] sm:$0x1]
    %v230 = vlaneseq
    %v231 = vshrl.u32 %v230, 7
    %v232 = vsub.s32 0, %v231
    %v233 = vrot.slane %v229, %v232
    %vm234 = vcmp.eq.s32.totalorder %v64, %v233
    %vm235 = vcmp.eq.s32.totalorder %v65, %v233
    %vm236 = vcmp.eq.s32.totalorder %v66, %v233
    %vm237 = vcmp.eq.s32.totalorder %v67, %v233
    %vm238 = vcmp.eq.s32.totalorder %v68, %v233
    %vm239 = vcmp.eq.s32.totalorder %v69, %v233
    %vm240 = vcmp.eq.s32.totalorder %v70, %v233
    %vm241 = vcmp.eq.s32.totalorder %v71, %v233
    %vm242 = vcmp.eq.s32.totalorder %v72, %v233
    %vm243 = vcmp.eq.s32.totalorder %v73, %v233
    %vm244 = vcmp.eq.s32.totalorder %v74, %v233
    %vm245 = vcmp.eq.s32.totalorder %v75, %v233
    %vm246 = vcmp.eq.s32.totalorder %v76, %v233
    %vm247 = vcmp.eq.s32.totalorder %v77, %v233
    %vm248 = vcmp.eq.s32.totalorder %v78, %v233
    %vm249 = vcmp.eq.s32.totalorder %v79, %v233
    %vm250 = vcmp.eq.s32.totalorder %v80, %v233
    %vm251 = vcmp.eq.s32.totalorder %v81, %v233
    %vm252 = vcmp.eq.s32.totalorder %v82, %v233
    %vm253 = vcmp.eq.s32.totalorder %v83, %v233
    %vm254 = vcmp.eq.s32.totalorder %v84, %v233
    %vm255 = vcmp.eq.s32.totalorder %v85, %v233
    %vm256 = vcmp.eq.s32.totalorder %v86, %v233
    %vm257 = vcmp.eq.s32.totalorder %v87, %v233
    %vm258 = vcmp.eq.s32.totalorder %v88, %v233
    %vm259 = vcmp.eq.s32.totalorder %v89, %v233
    %vm260 = vcmp.eq.s32.totalorder %v90, %v233
    %vm261 = vcmp.eq.s32.totalorder %v91, %v233
    %vm262 = vcmp.eq.s32.totalorder %v92, %v233
    %vm263 = vcmp.eq.s32.totalorder %v93, %v233
    %vm264 = vcmp.eq.s32.totalorder %v94, %v233
    %vm265 = vcmp.eq.s32.totalorder %v95, %v233
    %v266 = vsel %vm234, 1, 0
    %v267 = vsel %vm235, 1, 0
    %v268 = vsel %vm236, 1, 0
    %v269 = vsel %vm237, 1, 0
    %v270 = vsel %vm238, 1, 0
    %v271 = vsel %vm239, 1, 0
    %v272 = vsel %vm240, 1, 0
    %v273 = vsel %vm241, 1, 0
    %v274 = vsel %vm242, 1, 0
    %v275 = vsel %vm243, 1, 0
    %v276 = vsel %vm244, 1, 0
    %v277 = vsel %vm245, 1, 0
    %v278 = vsel %vm246, 1, 0
    %v279 = vsel %vm247, 1, 0
    %v280 = vsel %vm248, 1, 0
    %v281 = vsel %vm249, 1, 0
    %v282 = vsel %vm250, 1, 0
    %v283 = vsel %vm251, 1, 0
    %v284 = vsel %vm252, 1, 0
    %v285 = vsel %vm253, 1, 0
    %v286 = vsel %vm254, 1, 0
    %v287 = vsel %vm255, 1, 0
    %v288 = vsel %vm256, 1, 0
    %v289 = vsel %vm257, 1, 0
    %v290 = vsel %vm258, 1, 0
    %v291 = vsel %vm259, 1, 0
    %v292 = vsel %vm260, 1, 0
    %v293 = vsel %vm261, 1, 0
    %v294 = vsel %vm262, 1, 0
    %v295 = vsel %vm263, 1, 0
    %v296 = vsel %vm264, 1, 0
    %v297 = vsel %vm265, 1, 0
    %v298 = vcvt.s32.f32 %v266
    %v299 = vcvt.s32.f32 %v267
    %v300 = vcvt.s32.f32 %v268
    %v301 = vcvt.s32.f32 %v269
    %v302 = vcvt.s32.f32 %v270
    %v303 = vcvt.s32.f32 %v271
    %v304 = vcvt.s32.f32 %v272
    %v305 = vcvt.s32.f32 %v273
    %v306 = vcvt.s32.f32 %v274
    %v307 = vcvt.s32.f32 %v275
    %v308 = vcvt.s32.f32 %v276
    %v309 = vcvt.s32.f32 %v277
    %v310 = vcvt.s32.f32 %v278
    %v311 = vcvt.s32.f32 %v279
    %v312 = vcvt.s32.f32 %v280
    %v313 = vcvt.s32.f32 %v281
    %v314 = vcvt.s32.f32 %v282
    %v315 = vcvt.s32.f32 %v283
    %v316 = vcvt.s32.f32 %v284
    %v317 = vcvt.s32.f32 %v285
    %v318 = vcvt.s32.f32 %v286
    %v319 = vcvt.s32.f32 %v287
    %v320 = vcvt.s32.f32 %v288
    %v321 = vcvt.s32.f32 %v289
    %v322 = vcvt.s32.f32 %v290
    %v323 = vcvt.s32.f32 %v291
    %v324 = vcvt.s32.f32 %v292
    %v325 = vcvt.s32.f32 %v293
    %v326 = vcvt.s32.f32 %v294
    %v327 = vcvt.s32.f32 %v295
    %v328 = vcvt.s32.f32 %v296
    %v329 = vcvt.s32.f32 %v297
    %v330 = vadd.f32 %v197, %v298
    %v331 = vadd.f32 %v198, %v299
    %v332 = vadd.f32 %v199, %v300
    %v333 = vadd.f32 %v200, %v301
    %v334 = vadd.f32 %v201, %v302
    %v335 = vadd.f32 %v202, %v303
    %v336 = vadd.f32 %v203, %v304
    %v337 = vadd.f32 %v204, %v305
    %v338 = vadd.f32 %v205, %v306
    %v339 = vadd.f32 %v206, %v307
    %v340 = vadd.f32 %v207, %v308
    %v341 = vadd.f32 %v208, %v309
    %v342 = vadd.f32 %v209, %v310
    %v343 = vadd.f32 %v210, %v311
    %v344 = vadd.f32 %v211, %v312
    %v345 = vadd.f32 %v212, %v313
    %v346 = vadd.f32 %v213, %v314
    %v347 = vadd.f32 %v214, %v315
    %v348 = vadd.f32 %v215, %v316
    %v349 = vadd.f32 %v216, %v317
    %v350 = vadd.f32 %v217, %v318
    %v351 = vadd.f32 %v218, %v319
    %v352 = vadd.f32 %v219, %v320
    %v353 = vadd.f32 %v220, %v321
    %v354 = vadd.f32 %v221, %v322
    %v355 = vadd.f32 %v222, %v323
    %v356 = vadd.f32 %v223, %v324
    %v357 = vadd.f32 %v224, %v325
    %v358 = vadd.f32 %v225, %v326
    %v359 = vadd.f32 %v226, %v327
    %v360 = vadd.f32 %v227, %v328
    %v361 = vadd.f32 %v228, %v329
    %v362 = vld [vmem:[#allocation2 + $0x2] sm:$0x1]
    %v363 = vlaneseq
    %v364 = vshrl.u32 %v363, 7
    %v365 = vsub.s32 0, %v364
    %v366 = vrot.slane %v362, %v365
    %vm367 = vcmp.eq.s32.totalorder %v64, %v366
    %vm368 = vcmp.eq.s32.totalorder %v65, %v366
    %vm369 = vcmp.eq.s32.totalorder %v66, %v366
    %vm370 = vcmp.eq.s32.totalorder %v67, %v366
    %vm371 = vcmp.eq.s32.totalorder %v68, %v366
    %vm372 = vcmp.eq.s32.totalorder %v69, %v366
    %vm373 = vcmp.eq.s32.totalorder %v70, %v366
    %vm374 = vcmp.eq.s32.totalorder %v71, %v366
    %vm375 = vcmp.eq.s32.totalorder %v72, %v366
    %vm376 = vcmp.eq.s32.totalorder %v73, %v366
    %vm377 = vcmp.eq.s32.totalorder %v74, %v366
    %vm378 = vcmp.eq.s32.totalorder %v75, %v366
    %vm379 = vcmp.eq.s32.totalorder %v76, %v366
    %vm380 = vcmp.eq.s32.totalorder %v77, %v366
    %vm381 = vcmp.eq.s32.totalorder %v78, %v366
    %vm382 = vcmp.eq.s32.totalorder %v79, %v366
    %vm383 = vcmp.eq.s32.totalorder %v80, %v366
    %vm384 = vcmp.eq.s32.totalorder %v81, %v366
    %vm385 = vcmp.eq.s32.totalorder %v82, %v366
    %vm386 = vcmp.eq.s32.totalorder %v83, %v366
    %vm387 = vcmp.eq.s32.totalorder %v84, %v366
    %vm388 = vcmp.eq.s32.totalorder %v85, %v366
    %vm389 = vcmp.eq.s32.totalorder %v86, %v366
    %vm390 = vcmp.eq.s32.totalorder %v87, %v366
    %vm391 = vcmp.eq.s32.totalorder %v88, %v366
    %vm392 = vcmp.eq.s32.totalorder %v89, %v366
    %vm393 = vcmp.eq.s32.totalorder %v90, %v366
    %vm394 = vcmp.eq.s32.totalorder %v91, %v366
    %vm395 = vcmp.eq.s32.totalorder %v92, %v366
    %vm396 = vcmp.eq.s32.totalorder %v93, %v366
    %vm397 = vcmp.eq.s32.totalorder %v94, %v366
    %vm398 = vcmp.eq.s32.totalorder %v95, %v366
    %v399 = vsel %vm367, 1, 0
    %v400 = vsel %vm368, 1, 0
    %v401 = vsel %vm369, 1, 0
    %v402 = vsel %vm370, 1, 0
    %v403 = vsel %vm371, 1, 0
    %v404 = vsel %vm372, 1, 0
    %v405 = vsel %vm373, 1, 0
    %v406 = vsel %vm374, 1, 0
    %v407 = vsel %vm375, 1, 0
    %v408 = vsel %vm376, 1, 0
    %v409 = vsel %vm377, 1, 0
    %v410 = vsel %vm378, 1, 0
    %v411 = vsel %vm379, 1, 0
    %v412 = vsel %vm380, 1, 0
    %v413 = vsel %vm381, 1, 0
    %v414 = vsel %vm382, 1, 0
    %v415 = vsel %vm383, 1, 0
    %v416 = vsel %vm384, 1, 0
    %v417 = vsel %vm385, 1, 0
    %v418 = vsel %vm386, 1, 0
    %v419 = vsel %vm387, 1, 0
    %v420 = vsel %vm388, 1, 0
    %v421 = vsel %vm389, 1, 0
    %v422 = vsel %vm390, 1, 0
    %v423 = vsel %vm391, 1, 0
    %v424 = vsel %vm392, 1, 0
    %v425 = vsel %vm393, 1, 0
    %v426 = vsel %vm394, 1, 0
    %v427 = vsel %vm395, 1, 0
    %v428 = vsel %vm396, 1, 0
    %v429 = vsel %vm397, 1, 0
    %v430 = vsel %vm398, 1, 0
    %v431 = vcvt.s32.f32 %v399
    %v432 = vcvt.s32.f32 %v400
    %v433 = vcvt.s32.f32 %v401
    %v434 = vcvt.s32.f32 %v402
    %v435 = vcvt.s32.f32 %v403
    %v436 = vcvt.s32.f32 %v404
    %v437 = vcvt.s32.f32 %v405
    %v438 = vcvt.s32.f32 %v406
    %v439 = vcvt.s32.f32 %v407
    %v440 = vcvt.s32.f32 %v408
    %v441 = vcvt.s32.f32 %v409
    %v442 = vcvt.s32.f32 %v410
    %v443 = vcvt.s32.f32 %v411
    %v444 = vcvt.s32.f32 %v412
    %v445 = vcvt.s32.f32 %v413
    %v446 = vcvt.s32.f32 %v414
    %v447 = vcvt.s32.f32 %v415
    %v448 = vcvt.s32.f32 %v416
    %v449 = vcvt.s32.f32 %v417
    %v450 = vcvt.s32.f32 %v418
    %v451 = vcvt.s32.f32 %v419
    %v452 = vcvt.s32.f32 %v420
    %v453 = vcvt.s32.f32 %v421
    %v454 = vcvt.s32.f32 %v422
    %v455 = vcvt.s32.f32 %v423
    %v456 = vcvt.s32.f32 %v424
    %v457 = vcvt.s32.f32 %v425
    %v458 = vcvt.s32.f32 %v426
    %v459 = vcvt.s32.f32 %v427
    %v460 = vcvt.s32.f32 %v428
    %v461 = vcvt.s32.f32 %v429
    %v462 = vcvt.s32.f32 %v430
    %v463 = vadd.f32 %v330, %v431
    %v464 = vadd.f32 %v331, %v432
    %v465 = vadd.f32 %v332, %v433
    %v466 = vadd.f32 %v333, %v434
    %v467 = vadd.f32 %v334, %v435
    %v468 = vadd.f32 %v335, %v436
    %v469 = vadd.f32 %v336, %v437
    %v470 = vadd.f32 %v337, %v438
    %v471 = vadd.f32 %v338, %v439
    %v472 = vadd.f32 %v339, %v440
    %v473 = vadd.f32 %v340, %v441
    %v474 = vadd.f32 %v341, %v442
    %v475 = vadd.f32 %v342, %v443
    %v476 = vadd.f32 %v343, %v444
    %v477 = vadd.f32 %v344, %v445
    %v478 = vadd.f32 %v345, %v446
    %v479 = vadd.f32 %v346, %v447
    %v480 = vadd.f32 %v347, %v448
    %v481 = vadd.f32 %v348, %v449
    %v482 = vadd.f32 %v349, %v450
    %v483 = vadd.f32 %v350, %v451
    %v484 = vadd.f32 %v351, %v452
    %v485 = vadd.f32 %v352, %v453
    %v486 = vadd.f32 %v353, %v454
    %v487 = vadd.f32 %v354, %v455
    %v488 = vadd.f32 %v355, %v456
    %v489 = vadd.f32 %v356, %v457
    %v490 = vadd.f32 %v357, %v458
    %v491 = vadd.f32 %v358, %v459
    %v492 = vadd.f32 %v359, %v460
    %v493 = vadd.f32 %v360, %v461
    %v494 = vadd.f32 %v361, %v462
    %v495 = vld [vmem:[#allocation2 + $0x3] sm:$0x1]
    %v496 = vlaneseq
    %v497 = vshrl.u32 %v496, 7
    %v498 = vsub.s32 0, %v497
    %v499 = vrot.slane %v495, %v498
    %vm500 = vcmp.eq.s32.totalorder %v64, %v499
    %vm501 = vcmp.eq.s32.totalorder %v65, %v499
    %vm502 = vcmp.eq.s32.totalorder %v66, %v499
    %vm503 = vcmp.eq.s32.totalorder %v67, %v499
    %vm504 = vcmp.eq.s32.totalorder %v68, %v499
    %vm505 = vcmp.eq.s32.totalorder %v69, %v499
    %vm506 = vcmp.eq.s32.totalorder %v70, %v499
    %vm507 = vcmp.eq.s32.totalorder %v71, %v499
    %vm508 = vcmp.eq.s32.totalorder %v72, %v499
    %vm509 = vcmp.eq.s32.totalorder %v73, %v499
    %vm510 = vcmp.eq.s32.totalorder %v74, %v499
    %vm511 = vcmp.eq.s32.totalorder %v75, %v499
    %vm512 = vcmp.eq.s32.totalorder %v76, %v499
    %vm513 = vcmp.eq.s32.totalorder %v77, %v499
    %vm514 = vcmp.eq.s32.totalorder %v78, %v499
    %vm515 = vcmp.eq.s32.totalorder %v79, %v499
    %vm516 = vcmp.eq.s32.totalorder %v80, %v499
    %vm517 = vcmp.eq.s32.totalorder %v81, %v499
    %vm518 = vcmp.eq.s32.totalorder %v82, %v499
    %vm519 = vcmp.eq.s32.totalorder %v83, %v499
    %vm520 = vcmp.eq.s32.totalorder %v84, %v499
    %vm521 = vcmp.eq.s32.totalorder %v85, %v499
    %vm522 = vcmp.eq.s32.totalorder %v86, %v499
    %vm523 = vcmp.eq.s32.totalorder %v87, %v499
    %vm524 = vcmp.eq.s32.totalorder %v88, %v499
    %vm525 = vcmp.eq.s32.totalorder %v89, %v499
    %vm526 = vcmp.eq.s32.totalorder %v90, %v499
    %vm527 = vcmp.eq.s32.totalorder %v91, %v499
    %vm528 = vcmp.eq.s32.totalorder %v92, %v499
    %vm529 = vcmp.eq.s32.totalorder %v93, %v499
    %vm530 = vcmp.eq.s32.totalorder %v94, %v499
    %vm531 = vcmp.eq.s32.totalorder %v95, %v499
    %v532 = vsel %vm500, 1, 0
    %v533 = vsel %vm501, 1, 0
    %v534 = vsel %vm502, 1, 0
    %v535 = vsel %vm503, 1, 0
    %v536 = vsel %vm504, 1, 0
    %v537 = vsel %vm505, 1, 0
    %v538 = vsel %vm506, 1, 0
    %v539 = vsel %vm507, 1, 0
    %v540 = vsel %vm508, 1, 0
    %v541 = vsel %vm509, 1, 0
    %v542 = vsel %vm510, 1, 0
    %v543 = vsel %vm511, 1, 0
    %v544 = vsel %vm512, 1, 0
    %v545 = vsel %vm513, 1, 0
    %v546 = vsel %vm514, 1, 0
    %v547 = vsel %vm515, 1, 0
    %v548 = vsel %vm516, 1, 0
    %v549 = vsel %vm517, 1, 0
    %v550 = vsel %vm518, 1, 0
    %v551 = vsel %vm519, 1, 0
    %v552 = vsel %vm520, 1, 0
    %v553 = vsel %vm521, 1, 0
    %v554 = vsel %vm522, 1, 0
    %v555 = vsel %vm523, 1, 0
    %v556 = vsel %vm524, 1, 0
    %v557 = vsel %vm525, 1, 0
    %v558 = vsel %vm526, 1, 0
    %v559 = vsel %vm527, 1, 0
    %v560 = vsel %vm528, 1, 0
    %v561 = vsel %vm529, 1, 0
    %v562 = vsel %vm530, 1, 0
    %v563 = vsel %vm531, 1, 0
    %v564 = vcvt.s32.f32 %v532
    %v565 = vcvt.s32.f32 %v533
    %v566 = vcvt.s32.f32 %v534
    %v567 = vcvt.s32.f32 %v535
    %v568 = vcvt.s32.f32 %v536
    %v569 = vcvt.s32.f32 %v537
    %v570 = vcvt.s32.f32 %v538
    %v571 = vcvt.s32.f32 %v539
    %v572 = vcvt.s32.f32 %v540
    %v573 = vcvt.s32.f32 %v541
    %v574 = vcvt.s32.f32 %v542
    %v575 = vcvt.s32.f32 %v543
    %v576 = vcvt.s32.f32 %v544
    %v577 = vcvt.s32.f32 %v545
    %v578 = vcvt.s32.f32 %v546
    %v579 = vcvt.s32.f32 %v547
    %v580 = vcvt.s32.f32 %v548
    %v581 = vcvt.s32.f32 %v549
    %v582 = vcvt.s32.f32 %v550
    %v583 = vcvt.s32.f32 %v551
    %v584 = vcvt.s32.f32 %v552
    %v585 = vcvt.s32.f32 %v553
    %v586 = vcvt.s32.f32 %v554
    %v587 = vcvt.s32.f32 %v555
    %v588 = vcvt.s32.f32 %v556
    %v589 = vcvt.s32.f32 %v557
    %v590 = vcvt.s32.f32 %v558
    %v591 = vcvt.s32.f32 %v559
    %v592 = vcvt.s32.f32 %v560
    %v593 = vcvt.s32.f32 %v561
    %v594 = vcvt.s32.f32 %v562
    %v595 = vcvt.s32.f32 %v563
    %v596 = vadd.f32 %v463, %v564
    %v597 = vadd.f32 %v464, %v565
    %v598 = vadd.f32 %v465, %v566
    %v599 = vadd.f32 %v466, %v567
    %v600 = vadd.f32 %v467, %v568
    %v601 = vadd.f32 %v468, %v569
    %v602 = vadd.f32 %v469, %v570
    %v603 = vadd.f32 %v470, %v571
    %v604 = vadd.f32 %v471, %v572
    %v605 = vadd.f32 %v472, %v573
    %v606 = vadd.f32 %v473, %v574
    %v607 = vadd.f32 %v474, %v575
    %v608 = vadd.f32 %v475, %v576
    %v609 = vadd.f32 %v476, %v577
    %v610 = vadd.f32 %v477, %v578
    %v611 = vadd.f32 %v478, %v579
    %v612 = vadd.f32 %v479, %v580
    %v613 = vadd.f32 %v480, %v581
    %v614 = vadd.f32 %v481, %v582
    %v615 = vadd.f32 %v482, %v583
    %v616 = vadd.f32 %v483, %v584
    %v617 = vadd.f32 %v484, %v585
    %v618 = vadd.f32 %v485, %v586
    %v619 = vadd.f32 %v486, %v587
    %v620 = vadd.f32 %v487, %v588
    %v621 = vadd.f32 %v488, %v589
    %v622 = vadd.f32 %v489, %v590
    %v623 = vadd.f32 %v490, %v591
    %v624 = vadd.f32 %v491, %v592
    %v625 = vadd.f32 %v492, %v593
    %v626 = vadd.f32 %v493, %v594
    %v627 = vadd.f32 %v494, %v595
    %v628 = vld [vmem:[#allocation2 + $0x4] sm:$0x1]
    %v629 = vlaneseq
    %v630 = vshrl.u32 %v629, 7
    %v631 = vsub.s32 0, %v630
    %v632 = vrot.slane %v628, %v631
    %vm633 = vcmp.eq.s32.totalorder %v64, %v632
    %vm634 = vcmp.eq.s32.totalorder %v65, %v632
    %vm635 = vcmp.eq.s32.totalorder %v66, %v632
    %vm636 = vcmp.eq.s32.totalorder %v67, %v632
    %vm637 = vcmp.eq.s32.totalorder %v68, %v632
    %vm638 = vcmp.eq.s32.totalorder %v69, %v632
    %vm639 = vcmp.eq.s32.totalorder %v70, %v632
    %vm640 = vcmp.eq.s32.totalorder %v71, %v632
    %vm641 = vcmp.eq.s32.totalorder %v72, %v632
    %vm642 = vcmp.eq.s32.totalorder %v73, %v632
    %vm643 = vcmp.eq.s32.totalorder %v74, %v632
    %vm644 = vcmp.eq.s32.totalorder %v75, %v632
    %vm645 = vcmp.eq.s32.totalorder %v76, %v632
    %vm646 = vcmp.eq.s32.totalorder %v77, %v632
    %vm647 = vcmp.eq.s32.totalorder %v78, %v632
    %vm648 = vcmp.eq.s32.totalorder %v79, %v632
    %vm649 = vcmp.eq.s32.totalorder %v80, %v632
    %vm650 = vcmp.eq.s32.totalorder %v81, %v632
    %vm651 = vcmp.eq.s32.totalorder %v82, %v632
    %vm652 = vcmp.eq.s32.totalorder %v83, %v632
    %vm653 = vcmp.eq.s32.totalorder %v84, %v632
    %vm654 = vcmp.eq.s32.totalorder %v85, %v632
    %vm655 = vcmp.eq.s32.totalorder %v86, %v632
    %vm656 = vcmp.eq.s32.totalorder %v87, %v632
    %vm657 = vcmp.eq.s32.totalorder %v88, %v632
    %vm658 = vcmp.eq.s32.totalorder %v89, %v632
    %vm659 = vcmp.eq.s32.totalorder %v90, %v632
    %vm660 = vcmp.eq.s32.totalorder %v91, %v632
    %vm661 = vcmp.eq.s32.totalorder %v92, %v632
    %vm662 = vcmp.eq.s32.totalorder %v93, %v632
    %vm663 = vcmp.eq.s32.totalorder %v94, %v632
    %vm664 = vcmp.eq.s32.totalorder %v95, %v632
    %v665 = vsel %vm633, 1, 0
    %v666 = vsel %vm634, 1, 0
    %v667 = vsel %vm635, 1, 0
    %v668 = vsel %vm636, 1, 0
    %v669 = vsel %vm637, 1, 0
    %v670 = vsel %vm638, 1, 0
    %v671 = vsel %vm639, 1, 0
    %v672 = vsel %vm640, 1, 0
    %v673 = vsel %vm641, 1, 0
    %v674 = vsel %vm642, 1, 0
    %v675 = vsel %vm643, 1, 0
    %v676 = vsel %vm644, 1, 0
    %v677 = vsel %vm645, 1, 0
    %v678 = vsel %vm646, 1, 0
    %v679 = vsel %vm647, 1, 0
    %v680 = vsel %vm648, 1, 0
    %v681 = vsel %vm649, 1, 0
    %v682 = vsel %vm650, 1, 0
    %v683 = vsel %vm651, 1, 0
    %v684 = vsel %vm652, 1, 0
    %v685 = vsel %vm653, 1, 0
    %v686 = vsel %vm654, 1, 0
    %v687 = vsel %vm655, 1, 0
    %v688 = vsel %vm656, 1, 0
    %v689 = vsel %vm657, 1, 0
    %v690 = vsel %vm658, 1, 0
    %v691 = vsel %vm659, 1, 0
    %v692 = vsel %vm660, 1, 0
    %v693 = vsel %vm661, 1, 0
    %v694 = vsel %vm662, 1, 0
    %v695 = vsel %vm663, 1, 0
    %v696 = vsel %vm664, 1, 0
    %v697 = vcvt.s32.f32 %v665
    %v698 = vcvt.s32.f32 %v666
    %v699 = vcvt.s32.f32 %v667
    %v700 = vcvt.s32.f32 %v668
    %v701 = vcvt.s32.f32 %v669
    %v702 = vcvt.s32.f32 %v670
    %v703 = vcvt.s32.f32 %v671
    %v704 = vcvt.s32.f32 %v672
    %v705 = vcvt.s32.f32 %v673
    %v706 = vcvt.s32.f32 %v674
    %v707 = vcvt.s32.f32 %v675
    %v708 = vcvt.s32.f32 %v676
    %v709 = vcvt.s32.f32 %v677
    %v710 = vcvt.s32.f32 %v678
    %v711 = vcvt.s32.f32 %v679
    %v712 = vcvt.s32.f32 %v680
    %v713 = vcvt.s32.f32 %v681
    %v714 = vcvt.s32.f32 %v682
    %v715 = vcvt.s32.f32 %v683
    %v716 = vcvt.s32.f32 %v684
    %v717 = vcvt.s32.f32 %v685
    %v718 = vcvt.s32.f32 %v686
    %v719 = vcvt.s32.f32 %v687
    %v720 = vcvt.s32.f32 %v688
    %v721 = vcvt.s32.f32 %v689
    %v722 = vcvt.s32.f32 %v690
    %v723 = vcvt.s32.f32 %v691
    %v724 = vcvt.s32.f32 %v692
    %v725 = vcvt.s32.f32 %v693
    %v726 = vcvt.s32.f32 %v694
    %v727 = vcvt.s32.f32 %v695
    %v728 = vcvt.s32.f32 %v696
    %v729 = vadd.f32 %v596, %v697
    %v730 = vadd.f32 %v597, %v698
    %v731 = vadd.f32 %v598, %v699
    %v732 = vadd.f32 %v599, %v700
    %v733 = vadd.f32 %v600, %v701
    %v734 = vadd.f32 %v601, %v702
    %v735 = vadd.f32 %v602, %v703
    %v736 = vadd.f32 %v603, %v704
    %v737 = vadd.f32 %v604, %v705
    %v738 = vadd.f32 %v605, %v706
    %v739 = vadd.f32 %v606, %v707
    %v740 = vadd.f32 %v607, %v708
    %v741 = vadd.f32 %v608, %v709
    %v742 = vadd.f32 %v609, %v710
    %v743 = vadd.f32 %v610, %v711
    %v744 = vadd.f32 %v611, %v712
    %v745 = vadd.f32 %v612, %v713
    %v746 = vadd.f32 %v613, %v714
    %v747 = vadd.f32 %v614, %v715
    %v748 = vadd.f32 %v615, %v716
    %v749 = vadd.f32 %v616, %v717
    %v750 = vadd.f32 %v617, %v718
    %v751 = vadd.f32 %v618, %v719
    %v752 = vadd.f32 %v619, %v720
    %v753 = vadd.f32 %v620, %v721
    %v754 = vadd.f32 %v621, %v722
    %v755 = vadd.f32 %v622, %v723
    %v756 = vadd.f32 %v623, %v724
    %v757 = vadd.f32 %v624, %v725
    %v758 = vadd.f32 %v625, %v726
    %v759 = vadd.f32 %v626, %v727
    %v760 = vadd.f32 %v627, %v728
    %v761 = vld [vmem:[#allocation2 + $0x5] sm:$0x1]
    %v762 = vlaneseq
    %v763 = vshrl.u32 %v762, 7
    %v764 = vsub.s32 0, %v763
    %v765 = vrot.slane %v761, %v764
    %vm766 = vcmp.eq.s32.totalorder %v64, %v765
    %vm767 = vcmp.eq.s32.totalorder %v65, %v765
    %vm768 = vcmp.eq.s32.totalorder %v66, %v765
    %vm769 = vcmp.eq.s32.totalorder %v67, %v765
    %vm770 = vcmp.eq.s32.totalorder %v68, %v765
    %vm771 = vcmp.eq.s32.totalorder %v69, %v765
    %vm772 = vcmp.eq.s32.totalorder %v70, %v765
    %vm773 = vcmp.eq.s32.totalorder %v71, %v765
    %vm774 = vcmp.eq.s32.totalorder %v72, %v765
    %vm775 = vcmp.eq.s32.totalorder %v73, %v765
    %vm776 = vcmp.eq.s32.totalorder %v74, %v765
    %vm777 = vcmp.eq.s32.totalorder %v75, %v765
    %vm778 = vcmp.eq.s32.totalorder %v76, %v765
    %vm779 = vcmp.eq.s32.totalorder %v77, %v765
    %vm780 = vcmp.eq.s32.totalorder %v78, %v765
    %vm781 = vcmp.eq.s32.totalorder %v79, %v765
    %vm782 = vcmp.eq.s32.totalorder %v80, %v765
    %vm783 = vcmp.eq.s32.totalorder %v81, %v765
    %vm784 = vcmp.eq.s32.totalorder %v82, %v765
    %vm785 = vcmp.eq.s32.totalorder %v83, %v765
    %vm786 = vcmp.eq.s32.totalorder %v84, %v765
    %vm787 = vcmp.eq.s32.totalorder %v85, %v765
    %vm788 = vcmp.eq.s32.totalorder %v86, %v765
    %vm789 = vcmp.eq.s32.totalorder %v87, %v765
    %vm790 = vcmp.eq.s32.totalorder %v88, %v765
    %vm791 = vcmp.eq.s32.totalorder %v89, %v765
    %vm792 = vcmp.eq.s32.totalorder %v90, %v765
    %vm793 = vcmp.eq.s32.totalorder %v91, %v765
    %vm794 = vcmp.eq.s32.totalorder %v92, %v765
    %vm795 = vcmp.eq.s32.totalorder %v93, %v765
    %vm796 = vcmp.eq.s32.totalorder %v94, %v765
    %vm797 = vcmp.eq.s32.totalorder %v95, %v765
    %v798 = vsel %vm766, 1, 0
    %v799 = vsel %vm767, 1, 0
    %v800 = vsel %vm768, 1, 0
    %v801 = vsel %vm769, 1, 0
    %v802 = vsel %vm770, 1, 0
    %v803 = vsel %vm771, 1, 0
    %v804 = vsel %vm772, 1, 0
    %v805 = vsel %vm773, 1, 0
    %v806 = vsel %vm774, 1, 0
    %v807 = vsel %vm775, 1, 0
    %v808 = vsel %vm776, 1, 0
    %v809 = vsel %vm777, 1, 0
    %v810 = vsel %vm778, 1, 0
    %v811 = vsel %vm779, 1, 0
    %v812 = vsel %vm780, 1, 0
    %v813 = vsel %vm781, 1, 0
    %v814 = vsel %vm782, 1, 0
    %v815 = vsel %vm783, 1, 0
    %v816 = vsel %vm784, 1, 0
    %v817 = vsel %vm785, 1, 0
    %v818 = vsel %vm786, 1, 0
    %v819 = vsel %vm787, 1, 0
    %v820 = vsel %vm788, 1, 0
    %v821 = vsel %vm789, 1, 0
    %v822 = vsel %vm790, 1, 0
    %v823 = vsel %vm791, 1, 0
    %v824 = vsel %vm792, 1, 0
    %v825 = vsel %vm793, 1, 0
    %v826 = vsel %vm794, 1, 0
    %v827 = vsel %vm795, 1, 0
    %v828 = vsel %vm796, 1, 0
    %v829 = vsel %vm797, 1, 0
    %v830 = vcvt.s32.f32 %v798
    %v831 = vcvt.s32.f32 %v799
    %v832 = vcvt.s32.f32 %v800
    %v833 = vcvt.s32.f32 %v801
    %v834 = vcvt.s32.f32 %v802
    %v835 = vcvt.s32.f32 %v803
    %v836 = vcvt.s32.f32 %v804
    %v837 = vcvt.s32.f32 %v805
    %v838 = vcvt.s32.f32 %v806
    %v839 = vcvt.s32.f32 %v807
    %v840 = vcvt.s32.f32 %v808
    %v841 = vcvt.s32.f32 %v809
    %v842 = vcvt.s32.f32 %v810
    %v843 = vcvt.s32.f32 %v811
    %v844 = vcvt.s32.f32 %v812
    %v845 = vcvt.s32.f32 %v813
    %v846 = vcvt.s32.f32 %v814
    %v847 = vcvt.s32.f32 %v815
    %v848 = vcvt.s32.f32 %v816
    %v849 = vcvt.s32.f32 %v817
    %v850 = vcvt.s32.f32 %v818
    %v851 = vcvt.s32.f32 %v819
    %v852 = vcvt.s32.f32 %v820
    %v853 = vcvt.s32.f32 %v821
    %v854 = vcvt.s32.f32 %v822
    %v855 = vcvt.s32.f32 %v823
    %v856 = vcvt.s32.f32 %v824
    %v857 = vcvt.s32.f32 %v825
    %v858 = vcvt.s32.f32 %v826
    %v859 = vcvt.s32.f32 %v827
    %v860 = vcvt.s32.f32 %v828
    %v861 = vcvt.s32.f32 %v829
    %v862 = vadd.f32 %v729, %v830
    %v863 = vadd.f32 %v730, %v831
    %v864 = vadd.f32 %v731, %v832
    %v865 = vadd.f32 %v732, %v833
    %v866 = vadd.f32 %v733, %v834
    %v867 = vadd.f32 %v734, %v835
    %v868 = vadd.f32 %v735, %v836
    %v869 = vadd.f32 %v736, %v837
    %v870 = vadd.f32 %v737, %v838
    %v871 = vadd.f32 %v738, %v839
    %v872 = vadd.f32 %v739, %v840
    %v873 = vadd.f32 %v740, %v841
    %v874 = vadd.f32 %v741, %v842
    %v875 = vadd.f32 %v742, %v843
    %v876 = vadd.f32 %v743, %v844
    %v877 = vadd.f32 %v744, %v845
    %v878 = vadd.f32 %v745, %v846
    %v879 = vadd.f32 %v746, %v847
    %v880 = vadd.f32 %v747, %v848
    %v881 = vadd.f32 %v748, %v849
    %v882 = vadd.f32 %v749, %v850
    %v883 = vadd.f32 %v750, %v851
    %v884 = vadd.f32 %v751, %v852
    %v885 = vadd.f32 %v752, %v853
    %v886 = vadd.f32 %v753, %v854
    %v887 = vadd.f32 %v754, %v855
    %v888 = vadd.f32 %v755, %v856
    %v889 = vadd.f32 %v756, %v857
    %v890 = vadd.f32 %v757, %v858
    %v891 = vadd.f32 %v758, %v859
    %v892 = vadd.f32 %v759, %v860
    %v893 = vadd.f32 %v760, %v861
    %v894 = vld [vmem:[#allocation2 + $0x6] sm:$0x1]
    %v895 = vlaneseq
    %v896 = vshrl.u32 %v895, 7
    %v897 = vsub.s32 0, %v896
    %v898 = vrot.slane %v894, %v897
    %vm899 = vcmp.eq.s32.totalorder %v64, %v898
    %vm900 = vcmp.eq.s32.totalorder %v65, %v898
    %vm901 = vcmp.eq.s32.totalorder %v66, %v898
    %vm902 = vcmp.eq.s32.totalorder %v67, %v898
    %vm903 = vcmp.eq.s32.totalorder %v68, %v898
    %vm904 = vcmp.eq.s32.totalorder %v69, %v898
    %vm905 = vcmp.eq.s32.totalorder %v70, %v898
    %vm906 = vcmp.eq.s32.totalorder %v71, %v898
    %vm907 = vcmp.eq.s32.totalorder %v72, %v898
    %vm908 = vcmp.eq.s32.totalorder %v73, %v898
    %vm909 = vcmp.eq.s32.totalorder %v74, %v898
    %vm910 = vcmp.eq.s32.totalorder %v75, %v898
    %vm911 = vcmp.eq.s32.totalorder %v76, %v898
    %vm912 = vcmp.eq.s32.totalorder %v77, %v898
    %vm913 = vcmp.eq.s32.totalorder %v78, %v898
    %vm914 = vcmp.eq.s32.totalorder %v79, %v898
    %vm915 = vcmp.eq.s32.totalorder %v80, %v898
    %vm916 = vcmp.eq.s32.totalorder %v81, %v898
    %vm917 = vcmp.eq.s32.totalorder %v82, %v898
    %vm918 = vcmp.eq.s32.totalorder %v83, %v898
    %vm919 = vcmp.eq.s32.totalorder %v84, %v898
    %vm920 = vcmp.eq.s32.totalorder %v85, %v898
    %vm921 = vcmp.eq.s32.totalorder %v86, %v898
    %vm922 = vcmp.eq.s32.totalorder %v87, %v898
    %vm923 = vcmp.eq.s32.totalorder %v88, %v898
    %vm924 = vcmp.eq.s32.totalorder %v89, %v898
    %vm925 = vcmp.eq.s32.totalorder %v90, %v898
    %vm926 = vcmp.eq.s32.totalorder %v91, %v898
    %vm927 = vcmp.eq.s32.totalorder %v92, %v898
    %vm928 = vcmp.eq.s32.totalorder %v93, %v898
    %vm929 = vcmp.eq.s32.totalorder %v94, %v898
    %vm930 = vcmp.eq.s32.totalorder %v95, %v898
    %v931 = vsel %vm899, 1, 0
    %v932 = vsel %vm900, 1, 0
    %v933 = vsel %vm901, 1, 0
    %v934 = vsel %vm902, 1, 0
    %v935 = vsel %vm903, 1, 0
    %v936 = vsel %vm904, 1, 0
    %v937 = vsel %vm905, 1, 0
    %v938 = vsel %vm906, 1, 0
    %v939 = vsel %vm907, 1, 0
    %v940 = vsel %vm908, 1, 0
    %v941 = vsel %vm909, 1, 0
    %v942 = vsel %vm910, 1, 0
    %v943 = vsel %vm911, 1, 0
    %v944 = vsel %vm912, 1, 0
    %v945 = vsel %vm913, 1, 0
    %v946 = vsel %vm914, 1, 0
    %v947 = vsel %vm915, 1, 0
    %v948 = vsel %vm916, 1, 0
    %v949 = vsel %vm917, 1, 0
    %v950 = vsel %vm918, 1, 0
    %v951 = vsel %vm919, 1, 0
    %v952 = vsel %vm920, 1, 0
    %v953 = vsel %vm921, 1, 0
    %v954 = vsel %vm922, 1, 0
    %v955 = vsel %vm923, 1, 0
    %v956 = vsel %vm924, 1, 0
    %v957 = vsel %vm925, 1, 0
    %v958 = vsel %vm926, 1, 0
    %v959 = vsel %vm927, 1, 0
    %v960 = vsel %vm928, 1, 0
    %v961 = vsel %vm929, 1, 0
    %v962 = vsel %vm930, 1, 0
    %v963 = vcvt.s32.f32 %v931
    %v964 = vcvt.s32.f32 %v932
    %v965 = vcvt.s32.f32 %v933
    %v966 = vcvt.s32.f32 %v934
    %v967 = vcvt.s32.f32 %v935
    %v968 = vcvt.s32.f32 %v936
    %v969 = vcvt.s32.f32 %v937
    %v970 = vcvt.s32.f32 %v938
    %v971 = vcvt.s32.f32 %v939
    %v972 = vcvt.s32.f32 %v940
    %v973 = vcvt.s32.f32 %v941
    %v974 = vcvt.s32.f32 %v942
    %v975 = vcvt.s32.f32 %v943
    %v976 = vcvt.s32.f32 %v944
    %v977 = vcvt.s32.f32 %v945
    %v978 = vcvt.s32.f32 %v946
    %v979 = vcvt.s32.f32 %v947
    %v980 = vcvt.s32.f32 %v948
    %v981 = vcvt.s32.f32 %v949
    %v982 = vcvt.s32.f32 %v950
    %v983 = vcvt.s32.f32 %v951
    %v984 = vcvt.s32.f32 %v952
    %v985 = vcvt.s32.f32 %v953
    %v986 = vcvt.s32.f32 %v954
    %v987 = vcvt.s32.f32 %v955
    %v988 = vcvt.s32.f32 %v956
    %v989 = vcvt.s32.f32 %v957
    %v990 = vcvt.s32.f32 %v958
    %v991 = vcvt.s32.f32 %v959
    %v992 = vcvt.s32.f32 %v960
    %v993 = vcvt.s32.f32 %v961
    %v994 = vcvt.s32.f32 %v962
    %v995 = vadd.f32 %v862, %v963
    %v996 = vadd.f32 %v863, %v964
    %v997 = vadd.f32 %v864, %v965
    %v998 = vadd.f32 %v865, %v966
    %v999 = vadd.f32 %v866, %v967
    %v1000 = vadd.f32 %v867, %v968
    %v1001 = vadd.f32 %v868, %v969
    %v1002 = vadd.f32 %v869, %v970
    %v1003 = vadd.f32 %v870, %v971
    %v1004 = vadd.f32 %v871, %v972
    %v1005 = vadd.f32 %v872, %v973
    %v1006 = vadd.f32 %v873, %v974
    %v1007 = vadd.f32 %v874, %v975
    %v1008 = vadd.f32 %v875, %v976
    %v1009 = vadd.f32 %v876, %v977
    %v1010 = vadd.f32 %v877, %v978
    %v1011 = vadd.f32 %v878, %v979
    %v1012 = vadd.f32 %v879, %v980
    %v1013 = vadd.f32 %v880, %v981
    %v1014 = vadd.f32 %v881, %v982
    %v1015 = vadd.f32 %v882, %v983
    %v1016 = vadd.f32 %v883, %v984
    %v1017 = vadd.f32 %v884, %v985
    %v1018 = vadd.f32 %v885, %v986
    %v1019 = vadd.f32 %v886, %v987
    %v1020 = vadd.f32 %v887, %v988
    %v1021 = vadd.f32 %v888, %v989
    %v1022 = vadd.f32 %v889, %v990
    %v1023 = vadd.f32 %v890, %v991
    %v1024 = vadd.f32 %v891, %v992
    %v1025 = vadd.f32 %v892, %v993
    %v1026 = vadd.f32 %v893, %v994
    %v1027 = vld [vmem:[%s1] sm:$0xff]
    %v1028 = vld [vmem:[%s1 + $0x8] sm:$0xff]
    %v1029 = vld [vmem:[%s1 + $0x10] sm:$0xff]
    %v1030 = vld [vmem:[%s1 + $0x18] sm:$0xff]
    %v1031 = vld [vmem:[%s1 + $0x20] sm:$0xff]
    %v1032 = vld [vmem:[%s1 + $0x28] sm:$0xff]
    %v1033 = vld [vmem:[%s1 + $0x30] sm:$0xff]
    %v1034 = vld [vmem:[%s1 + $0x38] sm:$0xff]
    %v1035 = vld [vmem:[%s1 + $0x40] sm:$0xff]
    %v1036 = vld [vmem:[%s1 + $0x48] sm:$0xff]
    %v1037 = vld [vmem:[%s1 + $0x50] sm:$0xff]
    %v1038 = vld [vmem:[%s1 + $0x58] sm:$0xff]
    %v1039 = vld [vmem:[%s1 + $0x60] sm:$0xff]
    %v1040 = vld [vmem:[%s1 + $0x68] sm:$0xff]
    %v1041 = vld [vmem:[%s1 + $0x70] sm:$0xff]
    %v1042 = vld [vmem:[%s1 + $0x78] sm:$0xff]
    %v1043 = vld [vmem:[%s1 + $0x80] sm:$0xff]
    %v1044 = vld [vmem:[%s1 + $0x88] sm:$0xff]
    %v1045 = vld [vmem:[%s1 + $0x90] sm:$0xff]
    %v1046 = vld [vmem:[%s1 + $0x98] sm:$0xff]
    %v1047 = vld [vmem:[%s1 + $0xa0] sm:$0xff]
    %v1048 = vld [vmem:[%s1 + $0xa8] sm:$0xff]
    %v1049 = vld [vmem:[%s1 + $0xb0] sm:$0xff]
    %v1050 = vld [vmem:[%s1 + $0xb8] sm:$0xff]
    %v1051 = vld [vmem:[%s1 + $0xc0] sm:$0xff]
    %v1052 = vld [vmem:[%s1 + $0xc8] sm:$0xff]
    %v1053 = vld [vmem:[%s1 + $0xd0] sm:$0xff]
    %v1054 = vld [vmem:[%s1 + $0xd8] sm:$0xff]
    %v1055 = vld [vmem:[%s1 + $0xe0] sm:$0xff]
    %v1056 = vld [vmem:[%s1 + $0xe8] sm:$0xff]
    %v1057 = vld [vmem:[%s1 + $0xf0] sm:$0xff]
    %v1058 = vld [vmem:[%s1 + $0xf8] sm:$0xff]
    %1059 = vmatprep.subr.mxu0 0.0
    %1060 = vmatpush1.msra.mxu0 %v995
    %1061 = vmatprep.subr.mxu0 0.0
    %1062 = vmatpush1.msra.mxu0 %v996
    %1063 = vmatprep.subr.mxu0 0.0
    %1064 = vmatpush1.msra.mxu0 %v997
    %1065 = vmatprep.subr.mxu0 0.0
    %1066 = vmatpush1.msra.mxu0 %v998
    %1067 = vmatprep.subr.mxu0 0.0
    %1068 = vmatpush1.msra.mxu0 %v999
    %1069 = vmatprep.subr.mxu0 0.0
    %1070 = vmatpush1.msra.mxu0 %v1000
    %1071 = vmatprep.subr.mxu0 0.0
    %1072 = vmatpush1.msra.mxu0 %v1001
    %1073 = vmatprep.subr.mxu0 0.0
    %1074 = vmatpush1.msra.mxu0 %v1002
    %1075 = vmatprep.subr.mxu0 0.0
    %1076 = vmatpush1.msra.mxu0 %v1003
    %1077 = vmatprep.subr.mxu0 0.0
    %1078 = vmatpush1.msra.mxu0 %v1004
    %1079 = vmatprep.subr.mxu0 0.0
    %1080 = vmatpush1.msra.mxu0 %v1005
    %1081 = vmatprep.subr.mxu0 0.0
    %1082 = vmatpush1.msra.mxu0 %v1006
    %1083 = vmatprep.subr.mxu0 0.0
    %1084 = vmatpush1.msra.mxu0 %v1007
    %1085 = vmatprep.subr.mxu0 0.0
    %1086 = vmatpush1.msra.mxu0 %v1008
    %1087 = vmatprep.subr.mxu0 0.0
    %1088 = vmatpush1.msra.mxu0 %v1009
    %1089 = vmatprep.subr.mxu0 0.0
    %1090 = vmatpush1.msra.mxu0 %v1010
    %1091 = vmatprep.subr.mxu0 0.0
    %1092 = vmatpush1.msra.mxu0 %v1011
    %1093 = vmatprep.subr.mxu0 0.0
    %1094 = vmatpush1.msra.mxu0 %v1012
    %1095 = vmatprep.subr.mxu0 0.0
    %1096 = vmatpush1.msra.mxu0 %v1013
    %1097 = vmatprep.subr.mxu0 0.0
    %1098 = vmatpush1.msra.mxu0 %v1014
    %1099 = vmatprep.subr.mxu0 0.0
    %1100 = vmatpush1.msra.mxu0 %v1015
    %1101 = vmatprep.subr.mxu0 0.0
    %1102 = vmatpush1.msra.mxu0 %v1016
    %1103 = vmatprep.subr.mxu0 0.0
    %1104 = vmatpush1.msra.mxu0 %v1017
    %1105 = vmatprep.subr.mxu0 0.0
    %1106 = vmatpush1.msra.mxu0 %v1018
    %1107 = vmatprep.subr.mxu0 0.0
    %1108 = vmatpush1.msra.mxu0 %v1019
    %1109 = vmatprep.subr.mxu0 0.0
    %1110 = vmatpush1.msra.mxu0 %v1020
    %1111 = vmatprep.subr.mxu0 0.0
    %1112 = vmatpush1.msra.mxu0 %v1021
    %1113 = vmatprep.subr.mxu0 0.0
    %1114 = vmatpush1.msra.mxu0 %v1022
    %1115 = vmatprep.subr.mxu0 0.0
    %1116 = vmatpush1.msra.mxu0 %v1023
    %1117 = vmatprep.subr.mxu0 0.0
    %1118 = vmatpush1.msra.mxu0 %v1024
    %1119 = vmatprep.subr.mxu0 0.0
    %1120 = vmatpush1.msra.mxu0 %v1025
    %1121 = vmatprep.subr.mxu0 0.0
    %1122 = vmatpush1.msra.mxu0 %v1026
    %1123 = vmatprep.mubr.f32.mxu0 %v1028
    %1124 = vmatmul.mubr.f32.gmra.mrb[0].mxu0 %v1027
    %v1125 = vpop.f32.mrb[0].mxu0
    %v1126 = vadd.f32 0.0, %v1125
    %v1127 = vpop.f32.mrb[0].mxu0
    %1128 = vmatprep.mubr.f32.mxu0 %v1030
    %1129 = vmatmul.mubr.f32.gmra.mrb[0].mxu0 %v1029
    %v1130 = vpop.f32.mrb[0].mxu0
    %v1131 = vadd.f32 0.0, %v1130
    %v1132 = vpop.f32.mrb[0].mxu0
    %1133 = vmatprep.mubr.f32.mxu0 %v1032
    %1134 = vmatmul.mubr.f32.gmra.mrb[0].mxu0 %v1031
    %v1135 = vpop.f32.mrb[0].mxu0
    %v1136 = vadd.f32 0.0, %v1135
    %v1137 = vpop.f32.mrb[0].mxu0
    %1138 = vmatprep.mubr.f32.mxu0 %v1034
    %1139 = vmatmul.mubr.f32.gmra.mrb[0].mxu0 %v1033
    %v1140 = vpop.f32.mrb[0].mxu0
    %v1141 = vadd.f32 0.0, %v1140
    %v1142 = vpop.f32.mrb[0].mxu0
    %1143 = vmatprep.mubr.f32.mxu0 %v1036
    %1144 = vmatmul.mubr.f32.gmra.mrb[0].mxu0 %v1035
    %v1145 = vpop.f32.mrb[0].mxu0
    %v1146 = vadd.f32 0.0, %v1145
    %v1147 = vpop.f32.mrb[0].mxu0
    %1148 = vmatprep.mubr.f32.mxu0 %v1038
    %1149 = vmatmul.mubr.f32.gmra.mrb[0].mxu0 %v1037
    %v1150 = vpop.f32.mrb[0].mxu0
    %v1151 = vadd.f32 0.0, %v1150
    %v1152 = vpop.f32.mrb[0].mxu0
    %1153 = vmatprep.mubr.f32.mxu0 %v1040
    %1154 = vmatmul.mubr.f32.gmra.mrb[0].mxu0 %v1039
    %v1155 = vpop.f32.mrb[0].mxu0
    %v1156 = vadd.f32 0.0, %v1155
    %v1157 = vpop.f32.mrb[0].mxu0
    %1158 = vmatprep.mubr.f32.mxu0 %v1042
    %1159 = vmatmul.mubr.f32.gmra.mrb[0].mxu0 %v1041
    %v1160 = vpop.f32.mrb[0].mxu0
    %v1161 = vadd.f32 0.0, %v1160
    %v1162 = vpop.f32.mrb[0].mxu0
    %1163 = vmatprep.mubr.f32.mxu0 %v1044
    %1164 = vmatmul.mubr.f32.gmra.mrb[0].mxu0 %v1043
    %v1165 = vpop.f32.mrb[0].mxu0
    %v1166 = vadd.f32 0.0, %v1165
    %v1167 = vpop.f32.mrb[0].mxu0
    %1168 = vmatprep.mubr.f32.mxu0 %v1046
    %1169 = vmatmul.mubr.f32.gmra.mrb[0].mxu0 %v1045
    %v1170 = vpop.f32.mrb[0].mxu0
    %v1171 = vadd.f32 0.0, %v1170
    %v1172 = vpop.f32.mrb[0].mxu0
    %1173 = vmatprep.mubr.f32.mxu0 %v1048
    %1174 = vmatmul.mubr.f32.gmra.mrb[0].mxu0 %v1047
    %v1175 = vpop.f32.mrb[0].mxu0
    %v1176 = vadd.f32 0.0, %v1175
    %v1177 = vpop.f32.mrb[0].mxu0
    %1178 = vmatprep.mubr.f32.mxu0 %v1050
    %1179 = vmatmul.mubr.f32.gmra.mrb[0].mxu0 %v1049
    %v1180 = vpop.f32.mrb[0].mxu0
    %v1181 = vadd.f32 0.0, %v1180
    %v1182 = vpop.f32.mrb[0].mxu0
    %1183 = vmatprep.mubr.f32.mxu0 %v1052
    %1184 = vmatmul.mubr.f32.gmra.mrb[0].mxu0 %v1051
    %v1185 = vpop.f32.mrb[0].mxu0
    %v1186 = vadd.f32 0.0, %v1185
    %v1187 = vpop.f32.mrb[0].mxu0
    %1188 = vmatprep.mubr.f32.mxu0 %v1054
    %1189 = vmatmul.mubr.f32.gmra.mrb[0].mxu0 %v1053
    %v1190 = vpop.f32.mrb[0].mxu0
    %v1191 = vadd.f32 0.0, %v1190
    %v1192 = vpop.f32.mrb[0].mxu0
    %1193 = vmatprep.mubr.f32.mxu0 %v1056
    %1194 = vmatmul.mubr.f32.gmra.mrb[0].mxu0 %v1055
    %v1195 = vpop.f32.mrb[0].mxu0
    %v1196 = vadd.f32 0.0, %v1195
    %v1197 = vpop.f32.mrb[0].mxu0
    %1198 = vmatprep.mubr.f32.mxu0 %v1058
    %1199 = vmatmul.mubr.f32.gmra.mrb[0].mxu0 %v1057
    %v1200 = vpop.f32.mrb[0].mxu0
    %v1201 = vadd.f32 0.0, %v1200
    %v1202 = vpop.f32.mrb[0].mxu0
    %1203 = vdwg.mxu0
    %v1204 = vld [vmem:[#allocation5] sm:$0xff]
    %v1205 = vld [vmem:[#allocation5 + $0x8] sm:$0xff]
    %v1206 = vld [vmem:[#allocation5 + $0x10] sm:$0xff]
    %v1207 = vld [vmem:[#allocation5 + $0x18] sm:$0xff]
    %v1208 = vld [vmem:[#allocation5 + $0x20] sm:$0xff]
    %v1209 = vld [vmem:[#allocation5 + $0x28] sm:$0xff]
    %v1210 = vld [vmem:[#allocation5 + $0x30] sm:$0xff]
    %v1211 = vld [vmem:[#allocation5 + $0x38] sm:$0xff]
    %v1212 = vld [vmem:[#allocation5 + $0x40] sm:$0xff]
    %v1213 = vld [vmem:[#allocation5 + $0x48] sm:$0xff]
    %v1214 = vld [vmem:[#allocation5 + $0x50] sm:$0xff]
    %v1215 = vld [vmem:[#allocation5 + $0x58] sm:$0xff]
    %v1216 = vld [vmem:[#allocation5 + $0x60] sm:$0xff]
    %v1217 = vld [vmem:[#allocation5 + $0x68] sm:$0xff]
    %v1218 = vld [vmem:[#allocation5 + $0x70] sm:$0xff]
    %v1219 = vld [vmem:[#allocation5 + $0x78] sm:$0xff]
    %v1220 = vld [vmem:[%s3] sm:$0xff]
    %v1221 = vld [vmem:[%s3 + $0x8] sm:$0xff]
    %v1222 = vld [vmem:[%s3 + $0x10] sm:$0xff]
    %v1223 = vld [vmem:[%s3 + $0x18] sm:$0xff]
    %v1224 = vld [vmem:[%s3 + $0x20] sm:$0xff]
    %v1225 = vld [vmem:[%s3 + $0x28] sm:$0xff]
    %v1226 = vld [vmem:[%s3 + $0x30] sm:$0xff]
    %v1227 = vld [vmem:[%s3 + $0x38] sm:$0xff]
    %v1228 = vld [vmem:[%s3 + $0x40] sm:$0xff]
    %v1229 = vld [vmem:[%s3 + $0x48] sm:$0xff]
    %v1230 = vld [vmem:[%s3 + $0x50] sm:$0xff]
    %v1231 = vld [vmem:[%s3 + $0x58] sm:$0xff]
    %v1232 = vld [vmem:[%s3 + $0x60] sm:$0xff]
    %v1233 = vld [vmem:[%s3 + $0x68] sm:$0xff]
    %v1234 = vld [vmem:[%s3 + $0x70] sm:$0xff]
    %v1235 = vld [vmem:[%s3 + $0x78] sm:$0xff]
    %1237 = vset.pattern.permute.xlu0 0
    %1238 = vperm.xlu0 %1237, %v1220
    %v1239 = vpop.permute.xlu0 %1238
    %1242 = vset.pattern.permute.xlu0 0
    %1243 = vperm.xlu0 %1242, %v1221
    %v1244 = vpop.permute.xlu0 %1243
    %1247 = vset.pattern.permute.xlu0 0
    %1248 = vperm.xlu0 %1247, %v1222
    %v1249 = vpop.permute.xlu0 %1248
    %1252 = vset.pattern.permute.xlu0 0
    %1253 = vperm.xlu0 %1252, %v1223
    %v1254 = vpop.permute.xlu0 %1253
    %1257 = vset.pattern.permute.xlu0 0
    %1258 = vperm.xlu0 %1257, %v1224
    %v1259 = vpop.permute.xlu0 %1258
    %1262 = vset.pattern.permute.xlu0 0
    %1263 = vperm.xlu0 %1262, %v1225
    %v1264 = vpop.permute.xlu0 %1263
    %1267 = vset.pattern.permute.xlu0 0
    %1268 = vperm.xlu0 %1267, %v1226
    %v1269 = vpop.permute.xlu0 %1268
    %1272 = vset.pattern.permute.xlu0 0
    %1273 = vperm.xlu0 %1272, %v1227
    %v1274 = vpop.permute.xlu0 %1273
    %1277 = vset.pattern.permute.xlu0 0
    %1278 = vperm.xlu0 %1277, %v1228
    %v1279 = vpop.permute.xlu0 %1278
    %1282 = vset.pattern.permute.xlu0 0
    %1283 = vperm.xlu0 %1282, %v1229
    %v1284 = vpop.permute.xlu0 %1283
    %1287 = vset.pattern.permute.xlu0 0
    %1288 = vperm.xlu0 %1287, %v1230
    %v1289 = vpop.permute.xlu0 %1288
    %1292 = vset.pattern.permute.xlu0 0
    %1293 = vperm.xlu0 %1292, %v1231
    %v1294 = vpop.permute.xlu0 %1293
    %1297 = vset.pattern.permute.xlu0 0
    %1298 = vperm.xlu0 %1297, %v1232
    %v1299 = vpop.permute.xlu0 %1298
    %1302 = vset.pattern.permute.xlu0 0
    %1303 = vperm.xlu0 %1302, %v1233
    %v1304 = vpop.permute.xlu0 %1303
    %1307 = vset.pattern.permute.xlu0 0
    %1308 = vperm.xlu0 %1307, %v1234
    %v1309 = vpop.permute.xlu0 %1308
    %1312 = vset.pattern.permute.xlu0 0
    %1313 = vperm.xlu0 %1312, %v1235
    %v1314 = vpop.permute.xlu0 %1313
    %1316 = vmatprep.subr.mxu0 0.0
    %1317 = vmatpush1.msra.mxu0 %v1126
    %1318 = vmatprep.subr.mxu0 0.0
    %1319 = vmatpush1.msra.mxu0 %v1131
    %1320 = vmatprep.subr.mxu0 0.0
    %1321 = vmatpush1.msra.mxu0 %v1136
    %1322 = vmatprep.subr.mxu0 0.0
    %1323 = vmatpush1.msra.mxu0 %v1141
    %1324 = vmatprep.subr.mxu0 0.0
    %1325 = vmatpush1.msra.mxu0 %v1146
    %1326 = vmatprep.subr.mxu0 0.0
    %1327 = vmatpush1.msra.mxu0 %v1151
    %1328 = vmatprep.subr.mxu0 0.0
    %1329 = vmatpush1.msra.mxu0 %v1156
    %1330 = vmatprep.subr.mxu0 0.0
    %1331 = vmatpush1.msra.mxu0 %v1161
    %1332 = vmatprep.subr.mxu0 0.0
    %1333 = vmatpush1.msra.mxu0 %v1166
    %1334 = vmatprep.subr.mxu0 0.0
    %1335 = vmatpush1.msra.mxu0 %v1171
    %1336 = vmatprep.subr.mxu0 0.0
    %1337 = vmatpush1.msra.mxu0 %v1176
    %1338 = vmatprep.subr.mxu0 0.0
    %1339 = vmatpush1.msra.mxu0 %v1181
    %1340 = vmatprep.subr.mxu0 0.0
    %1341 = vmatpush1.msra.mxu0 %v1186
    %1342 = vmatprep.subr.mxu0 0.0
    %1343 = vmatpush1.msra.mxu0 %v1191
    %1344 = vmatprep.subr.mxu0 0.0
    %1345 = vmatpush1.msra.mxu0 %v1196
    %1346 = vmatprep.subr.mxu0 0.0
    %1347 = vmatpush1.msra.mxu0 %v1201
    %1348 = vmatprep.subr.mxu0 0.0
    %1349 = vmatpush1.msra.mxu0 0.0
    %1350 = vmatprep.subr.mxu0 0.0
    %1351 = vmatpush1.msra.mxu0 0.0
    %1352 = vmatprep.subr.mxu0 0.0
    %1353 = vmatpush1.msra.mxu0 0.0
    %1354 = vmatprep.subr.mxu0 0.0
    %1355 = vmatpush1.msra.mxu0 0.0
    %1356 = vmatprep.subr.mxu0 0.0
    %1357 = vmatpush1.msra.mxu0 0.0
    %1358 = vmatprep.subr.mxu0 0.0
    %1359 = vmatpush1.msra.mxu0 0.0
    %1360 = vmatprep.subr.mxu0 0.0
    %1361 = vmatpush1.msra.mxu0 0.0
    %1362 = vmatprep.subr.mxu0 0.0
    %1363 = vmatpush1.msra.mxu0 0.0
    %1364 = vmatprep.subr.mxu0 0.0
    %1365 = vmatpush1.msra.mxu0 0.0
    %1366 = vmatprep.subr.mxu0 0.0
    %1367 = vmatpush1.msra.mxu0 0.0
    %1368 = vmatprep.subr.mxu0 0.0
    %1369 = vmatpush1.msra.mxu0 0.0
    %1370 = vmatprep.subr.mxu0 0.0
    %1371 = vmatpush1.msra.mxu0 0.0
    %1372 = vmatprep.subr.mxu0 0.0
    %1373 = vmatpush1.msra.mxu0 0.0
    %1374 = vmatprep.subr.mxu0 0.0
    %1375 = vmatpush1.msra.mxu0 0.0
    %1376 = vmatprep.subr.mxu0 0.0
    %1377 = vmatpush1.msra.mxu0 0.0
    %1378 = vmatprep.subr.mxu0 0.0
    %1379 = vmatpush1.msra.mxu0 0.0
    %1380 = vmatprep.mubr.f32.mxu0 0.0
    %1381 = vmatmul.mubr.f32.gmra.mrb[0].mxu0 %v1204
    %v1382 = vpop.f32.mrb[0].mxu0
    %v1383 = vadd.f32 %v1239, %v1382
    %v1384 = vpop.f32.mrb[0].mxu0
    %1385 = vmatprep.mubr.f32.mxu0 0.0
    %1386 = vmatmul.mubr.f32.gmra.mrb[0].mxu0 %v1205
    %v1387 = vpop.f32.mrb[0].mxu0
    %v1388 = vadd.f32 %v1244, %v1387
    %v1389 = vpop.f32.mrb[0].mxu0
    %1390 = vmatprep.mubr.f32.mxu0 0.0
    %1391 = vmatmul.mubr.f32.gmra.mrb[0].mxu0 %v1206
    %v1392 = vpop.f32.mrb[0].mxu0
    %v1393 = vadd.f32 %v1249, %v1392
    %v1394 = vpop.f32.mrb[0].mxu0
    %1395 = vmatprep.mubr.f32.mxu0 0.0
    %1396 = vmatmul.mubr.f32.gmra.mrb[0].mxu0 %v1207
    %v1397 = vpop.f32.mrb[0].mxu0
    %v1398 = vadd.f32 %v1254, %v1397
    %v1399 = vpop.f32.mrb[0].mxu0
    %1400 = vmatprep.mubr.f32.mxu0 0.0
    %1401 = vmatmul.mubr.f32.gmra.mrb[0].mxu0 %v1208
    %v1402 = vpop.f32.mrb[0].mxu0
    %v1403 = vadd.f32 %v1259, %v1402
    %v1404 = vpop.f32.mrb[0].mxu0
    %1405 = vmatprep.mubr.f32.mxu0 0.0
    %1406 = vmatmul.mubr.f32.gmra.mrb[0].mxu0 %v1209
    %v1407 = vpop.f32.mrb[0].mxu0
    %v1408 = vadd.f32 %v1264, %v1407
    %v1409 = vpop.f32.mrb[0].mxu0
    %1410 = vmatprep.mubr.f32.mxu0 0.0
    %1411 = vmatmul.mubr.f32.gmra.mrb[0].mxu0 %v1210
    %v1412 = vpop.f32.mrb[0].mxu0
    %v1413 = vadd.f32 %v1269, %v1412
    %v1414 = vpop.f32.mrb[0].mxu0
    %1415 = vmatprep.mubr.f32.mxu0 0.0
    %1416 = vmatmul.mubr.f32.gmra.mrb[0].mxu0 %v1211
    %v1417 = vpop.f32.mrb[0].mxu0
    %v1418 = vadd.f32 %v1274, %v1417
    %v1419 = vpop.f32.mrb[0].mxu0
    %1420 = vmatprep.mubr.f32.mxu0 0.0
    %1421 = vmatmul.mubr.f32.gmra.mrb[0].mxu0 %v1212
    %v1422 = vpop.f32.mrb[0].mxu0
    %v1423 = vadd.f32 %v1279, %v1422
    %v1424 = vpop.f32.mrb[0].mxu0
    %1425 = vmatprep.mubr.f32.mxu0 0.0
    %1426 = vmatmul.mubr.f32.gmra.mrb[0].mxu0 %v1213
    %v1427 = vpop.f32.mrb[0].mxu0
    %v1428 = vadd.f32 %v1284, %v1427
    %v1429 = vpop.f32.mrb[0].mxu0
    %1430 = vmatprep.mubr.f32.mxu0 0.0
    %1431 = vmatmul.mubr.f32.gmra.mrb[0].mxu0 %v1214
    %v1432 = vpop.f32.mrb[0].mxu0
    %v1433 = vadd.f32 %v1289, %v1432
    %v1434 = vpop.f32.mrb[0].mxu0
    %1435 = vmatprep.mubr.f32.mxu0 0.0
    %1436 = vmatmul.mubr.f32.gmra.mrb[0].mxu0 %v1215
    %v1437 = vpop.f32.mrb[0].mxu0
    %v1438 = vadd.f32 %v1294, %v1437
    %v1439 = vpop.f32.mrb[0].mxu0
    %1440 = vmatprep.mubr.f32.mxu0 0.0
    %1441 = vmatmul.mubr.f32.gmra.mrb[0].mxu0 %v1216
    %v1442 = vpop.f32.mrb[0].mxu0
    %v1443 = vadd.f32 %v1299, %v1442
    %v1444 = vpop.f32.mrb[0].mxu0
    %1445 = vmatprep.mubr.f32.mxu0 0.0
    %1446 = vmatmul.mubr.f32.gmra.mrb[0].mxu0 %v1217
    %v1447 = vpop.f32.mrb[0].mxu0
    %v1448 = vadd.f32 %v1304, %v1447
    %v1449 = vpop.f32.mrb[0].mxu0
    %1450 = vmatprep.mubr.f32.mxu0 0.0
    %1451 = vmatmul.mubr.f32.gmra.mrb[0].mxu0 %v1218
    %v1452 = vpop.f32.mrb[0].mxu0
    %v1453 = vadd.f32 %v1309, %v1452
    %v1454 = vpop.f32.mrb[0].mxu0
    %1455 = vmatprep.mubr.f32.mxu0 0.0
    %1456 = vmatmul.mubr.f32.gmra.mrb[0].mxu0 %v1219
    %v1457 = vpop.f32.mrb[0].mxu0
    %v1458 = vadd.f32 %v1314, %v1457
    %v1459 = vpop.f32.mrb[0].mxu0
    %1460 = vdwg.mxu0
    %v1461 = vmax.f32 %v1383, 0.0
    %v1462 = vmax.f32 %v1388, 0.0
    %v1463 = vmax.f32 %v1393, 0.0
    %v1464 = vmax.f32 %v1398, 0.0
    %v1465 = vmax.f32 %v1403, 0.0
    %v1466 = vmax.f32 %v1408, 0.0
    %v1467 = vmax.f32 %v1413, 0.0
    %v1468 = vmax.f32 %v1418, 0.0
    %v1469 = vmax.f32 %v1423, 0.0
    %v1470 = vmax.f32 %v1428, 0.0
    %v1471 = vmax.f32 %v1433, 0.0
    %v1472 = vmax.f32 %v1438, 0.0
    %v1473 = vmax.f32 %v1443, 0.0
    %v1474 = vmax.f32 %v1448, 0.0
    %v1475 = vmax.f32 %v1453, 0.0
    %v1476 = vmax.f32 %v1458, 0.0
    %v1477 = vld [vmem:[#allocation7] sm:$0xff]
    %v1478 = vld [vmem:[#allocation7 + $0x8] sm:$0xff]
    %v1479 = vld [vmem:[#allocation7 + $0x10] sm:$0xff]
    %v1480 = vld [vmem:[#allocation7 + $0x18] sm:$0xff]
    %v1481 = vld [vmem:[#allocation7 + $0x20] sm:$0xff]
    %v1482 = vld [vmem:[#allocation7 + $0x28] sm:$0xff]
    %v1483 = vld [vmem:[#allocation7 + $0x30] sm:$0xff]
    %v1484 = vld [vmem:[#allocation7 + $0x38] sm:$0xff]
    %v1485 = vld [vmem:[#allocation7 + $0x40] sm:$0xff]
    %v1486 = vld [vmem:[#allocation7 + $0x48] sm:$0xff]
    %v1487 = vld [vmem:[#allocation7 + $0x50] sm:$0xff]
    %v1488 = vld [vmem:[#allocation7 + $0x58] sm:$0xff]
    %v1489 = vld [vmem:[#allocation7 + $0x60] sm:$0xff]
    %v1490 = vld [vmem:[#allocation7 + $0x68] sm:$0xff]
    %v1491 = vld [vmem:[#allocation7 + $0x70] sm:$0xff]
    %v1492 = vld [vmem:[#allocation7 + $0x78] sm:$0xff]
    %v1493 = vld [vmem:[%s5] sm:$0xff]
    %v1494 = vld [vmem:[%s5 + $0x8] sm:$0xff]
    %v1495 = vld [vmem:[%s5 + $0x10] sm:$0xff]
    %v1496 = vld [vmem:[%s5 + $0x18] sm:$0xff]
    %v1497 = vld [vmem:[%s5 + $0x20] sm:$0xff]
    %v1498 = vld [vmem:[%s5 + $0x28] sm:$0xff]
    %v1499 = vld [vmem:[%s5 + $0x30] sm:$0xff]
    %v1500 = vld [vmem:[%s5 + $0x38] sm:$0xff]
    %v1501 = vld [vmem:[%s5 + $0x40] sm:$0xff]
    %v1502 = vld [vmem:[%s5 + $0x48] sm:$0xff]
    %v1503 = vld [vmem:[%s5 + $0x50] sm:$0xff]
    %v1504 = vld [vmem:[%s5 + $0x58] sm:$0xff]
    %v1505 = vld [vmem:[%s5 + $0x60] sm:$0xff]
    %v1506 = vld [vmem:[%s5 + $0x68] sm:$0xff]
    %v1507 = vld [vmem:[%s5 + $0x70] sm:$0xff]
    %v1508 = vld [vmem:[%s5 + $0x78] sm:$0xff]
    %1510 = vset.pattern.permute.xlu0 0
    %1511 = vperm.xlu0 %1510, %v1493
    %v1512 = vpop.permute.xlu0 %1511
    %1515 = vset.pattern.permute.xlu0 0
    %1516 = vperm.xlu0 %1515, %v1494
    %v1517 = vpop.permute.xlu0 %1516
    %1520 = vset.pattern.permute.xlu0 0
    %1521 = vperm.xlu0 %1520, %v1495
    %v1522 = vpop.permute.xlu0 %1521
    %1525 = vset.pattern.permute.xlu0 0
    %1526 = vperm.xlu0 %1525, %v1496
    %v1527 = vpop.permute.xlu0 %1526
    %1530 = vset.pattern.permute.xlu0 0
    %1531 = vperm.xlu0 %1530, %v1497
    %v1532 = vpop.permute.xlu0 %1531
    %1535 = vset.pattern.permute.xlu0 0
    %1536 = vperm.xlu0 %1535, %v1498
    %v1537 = vpop.permute.xlu0 %1536
    %1540 = vset.pattern.permute.xlu0 0
    %1541 = vperm.xlu0 %1540, %v1499
    %v1542 = vpop.permute.xlu0 %1541
    %1545 = vset.pattern.permute.xlu0 0
    %1546 = vperm.xlu0 %1545, %v1500
    %v1547 = vpop.permute.xlu0 %1546
    %1550 = vset.pattern.permute.xlu0 0
    %1551 = vperm.xlu0 %1550, %v1501
    %v1552 = vpop.permute.xlu0 %1551
    %1554 = vset.pattern.permute.xlu0 0
    %1555 = vperm.xlu0 %1554, %v1502
    %v1556 = vpop.permute.xlu0 %1555
    %1558 = vset.pattern.permute.xlu0 0
    %1559 = vperm.xlu0 %1558, %v1503
    %v1560 = vpop.permute.xlu0 %1559
    %1562 = vset.pattern.permute.xlu0 0
    %1563 = vperm.xlu0 %1562, %v1504
    %v1564 = vpop.permute.xlu0 %1563
    %1566 = vset.pattern.permute.xlu0 0
    %1567 = vperm.xlu0 %1566, %v1505
    %v1568 = vpop.permute.xlu0 %1567
    %1570 = vset.pattern.permute.xlu0 0
    %1571 = vperm.xlu0 %1570, %v1506
    %v1572 = vpop.permute.xlu0 %1571
    %1574 = vset.pattern.permute.xlu0 0
    %1575 = vperm.xlu0 %1574, %v1507
    %v1576 = vpop.permute.xlu0 %1575
    %1578 = vset.pattern.permute.xlu0 0
    %1579 = vperm.xlu0 %1578, %v1508
    %v1580 = vpop.permute.xlu0 %1579
    %1581 = vmatprep.subr.mxu0 0.0
    %1582 = vmatpush1.msra.mxu0 %v1461
    %1583 = vmatprep.subr.mxu0 0.0
    %1584 = vmatpush1.msra.mxu0 %v1462
    %1585 = vmatprep.subr.mxu0 0.0
    %1586 = vmatpush1.msra.mxu0 %v1463
    %1587 = vmatprep.subr.mxu0 0.0
    %1588 = vmatpush1.msra.mxu0 %v1464
    %1589 = vmatprep.subr.mxu0 0.0
    %1590 = vmatpush1.msra.mxu0 %v1465
    %1591 = vmatprep.subr.mxu0 0.0
    %1592 = vmatpush1.msra.mxu0 %v1466
    %1593 = vmatprep.subr.mxu0 0.0
    %1594 = vmatpush1.msra.mxu0 %v1467
    %1595 = vmatprep.subr.mxu0 0.0
    %1596 = vmatpush1.msra.mxu0 %v1468
    %1597 = vmatprep.subr.mxu0 0.0
    %1598 = vmatpush1.msra.mxu0 %v1469
    %1599 = vmatprep.subr.mxu0 0.0
    %1600 = vmatpush1.msra.mxu0 %v1470
    %1601 = vmatprep.subr.mxu0 0.0
    %1602 = vmatpush1.msra.mxu0 %v1471
    %1603 = vmatprep.subr.mxu0 0.0
    %1604 = vmatpush1.msra.mxu0 %v1472
    %1605 = vmatprep.subr.mxu0 0.0
    %1606 = vmatpush1.msra.mxu0 %v1473
    %1607 = vmatprep.subr.mxu0 0.0
    %1608 = vmatpush1.msra.mxu0 %v1474
    %1609 = vmatprep.subr.mxu0 0.0
    %1610 = vmatpush1.msra.mxu0 %v1475
    %1611 = vmatprep.subr.mxu0 0.0
    %1612 = vmatpush1.msra.mxu0 %v1476
    %1613 = vmatprep.subr.mxu0 0.0
    %1614 = vmatpush1.msra.mxu0 0.0
    %1615 = vmatprep.subr.mxu0 0.0
    %1616 = vmatpush1.msra.mxu0 0.0
    %1617 = vmatprep.subr.mxu0 0.0
    %1618 = vmatpush1.msra.mxu0 0.0
    %1619 = vmatprep.subr.mxu0 0.0
    %1620 = vmatpush1.msra.mxu0 0.0
    %1621 = vmatprep.subr.mxu0 0.0
    %1622 = vmatpush1.msra.mxu0 0.0
    %1623 = vmatprep.subr.mxu0 0.0
    %1624 = vmatpush1.msra.mxu0 0.0
    %1625 = vmatprep.subr.mxu0 0.0
    %1626 = vmatpush1.msra.mxu0 0.0
    %1627 = vmatprep.subr.mxu0 0.0
    %1628 = vmatpush1.msra.mxu0 0.0
    %1629 = vmatprep.subr.mxu0 0.0
    %1630 = vmatpush1.msra.mxu0 0.0
    %1631 = vmatprep.subr.mxu0 0.0
    %1632 = vmatpush1.msra.mxu0 0.0
    %1633 = vmatprep.subr.mxu0 0.0
    %1634 = vmatpush1.msra.mxu0 0.0
    %1635 = vmatprep.subr.mxu0 0.0
    %1636 = vmatpush1.msra.mxu0 0.0
    %1637 = vmatprep.subr.mxu0 0.0
    %1638 = vmatpush1.msra.mxu0 0.0
    %1639 = vmatprep.subr.mxu0 0.0
    %1640 = vmatpush1.msra.mxu0 0.0
    %1641 = vmatprep.subr.mxu0 0.0
    %1642 = vmatpush1.msra.mxu0 0.0
    %1643 = vmatprep.subr.mxu0 0.0
    %1644 = vmatpush1.msra.mxu0 0.0
    %1645 = vmatprep.mubr.f32.mxu0 0.0
    %1646 = vmatmul.mubr.f32.gmra.mrb[0].mxu0 %v1477
    %v1647 = vpop.f32.mrb[0].mxu0
    %v1648 = vadd.f32 %v1512, %v1647
    %v1649 = vpop.f32.mrb[0].mxu0
    %1650 = vmatprep.mubr.f32.mxu0 0.0
    %1651 = vmatmul.mubr.f32.gmra.mrb[0].mxu0 %v1478
    %v1652 = vpop.f32.mrb[0].mxu0
    %v1653 = vadd.f32 %v1517, %v1652
    %v1654 = vpop.f32.mrb[0].mxu0
    %1655 = vmatprep.mubr.f32.mxu0 0.0
    %1656 = vmatmul.mubr.f32.gmra.mrb[0].mxu0 %v1479
    %v1657 = vpop.f32.mrb[0].mxu0
    %v1658 = vadd.f32 %v1522, %v1657
    %v1659 = vpop.f32.mrb[0].mxu0
    %1660 = vmatprep.mubr.f32.mxu0 0.0
    %1661 = vmatmul.mubr.f32.gmra.mrb[0].mxu0 %v1480
    %v1662 = vpop.f32.mrb[0].mxu0
    %v1663 = vadd.f32 %v1527, %v1662
    %v1664 = vpop.f32.mrb[0].mxu0
    %1665 = vmatprep.mubr.f32.mxu0 0.0
    %1666 = vmatmul.mubr.f32.gmra.mrb[0].mxu0 %v1481
    %v1667 = vpop.f32.mrb[0].mxu0
    %v1668 = vadd.f32 %v1532, %v1667
    %v1669 = vpop.f32.mrb[0].mxu0
    %1670 = vmatprep.mubr.f32.mxu0 0.0
    %1671 = vmatmul.mubr.f32.gmra.mrb[0].mxu0 %v1482
    %v1672 = vpop.f32.mrb[0].mxu0
    %v1673 = vadd.f32 %v1537, %v1672
    %v1674 = vpop.f32.mrb[0].mxu0
    %1675 = vmatprep.mubr.f32.mxu0 0.0
    %1676 = vmatmul.mubr.f32.gmra.mrb[0].mxu0 %v1483
    %v1677 = vpop.f32.mrb[0].mxu0
    %v1678 = vadd.f32 %v1542, %v1677
    %v1679 = vpop.f32.mrb[0].mxu0
    %1680 = vmatprep.mubr.f32.mxu0 0.0
    %1681 = vmatmul.mubr.f32.gmra.mrb[0].mxu0 %v1484
    %v1682 = vpop.f32.mrb[0].mxu0
    %v1683 = vadd.f32 %v1547, %v1682
    %v1684 = vpop.f32.mrb[0].mxu0
    %1685 = vmatprep.mubr.f32.mxu0 0.0
    %1686 = vmatmul.mubr.f32.gmra.mrb[0].mxu0 %v1485
    %v1687 = vpop.f32.mrb[0].mxu0
    %v1688 = vpop.f32.mrb[0].mxu0
    %1689 = vmatprep.mubr.f32.mxu0 0.0
    %1690 = vmatmul.mubr.f32.gmra.mrb[0].mxu0 %v1486
    %v1691 = vpop.f32.mrb[0].mxu0
    %v1692 = vpop.f32.mrb[0].mxu0
    %1693 = vmatprep.mubr.f32.mxu0 0.0
    %1694 = vmatmul.mubr.f32.gmra.mrb[0].mxu0 %v1487
    %v1695 = vpop.f32.mrb[0].mxu0
    %v1696 = vpop.f32.mrb[0].mxu0
    %1697 = vmatprep.mubr.f32.mxu0 0.0
    %1698 = vmatmul.mubr.f32.gmra.mrb[0].mxu0 %v1488
    %v1699 = vpop.f32.mrb[0].mxu0
    %v1700 = vpop.f32.mrb[0].mxu0
    %1701 = vmatprep.mubr.f32.mxu0 0.0
    %1702 = vmatmul.mubr.f32.gmra.mrb[0].mxu0 %v1489
    %v1703 = vpop.f32.mrb[0].mxu0
    %v1704 = vpop.f32.mrb[0].mxu0
    %1705 = vmatprep.mubr.f32.mxu0 0.0
    %1706 = vmatmul.mubr.f32.gmra.mrb[0].mxu0 %v1490
    %v1707 = vpop.f32.mrb[0].mxu0
    %v1708 = vpop.f32.mrb[0].mxu0
    %1709 = vmatprep.mubr.f32.mxu0 0.0
    %1710 = vmatmul.mubr.f32.gmra.mrb[0].mxu0 %v1491
    %v1711 = vpop.f32.mrb[0].mxu0
    %v1712 = vpop.f32.mrb[0].mxu0
    %1713 = vmatprep.mubr.f32.mxu0 0.0
    %1714 = vmatmul.mubr.f32.gmra.mrb[0].mxu0 %v1492
    %v1715 = vpop.f32.mrb[0].mxu0
    %v1716 = vpop.f32.mrb[0].mxu0
    %1717 = vdwg.mxu0
    %v1718 = vmul.f32 %v1648, %v1668
    %v1719 = vmul.f32 %v1653, %v1673
    %v1720 = vmul.f32 %v1658, %v1678
    %v1721 = vmul.f32 %v1663, %v1683
    %v1722 = vadd.f32 %v1718, %v1719
    %v1723 = vadd.f32 %v1722, %v1720
    %v1724 = vadd.f32 %v1723, %v1721
    %v1725 = vrot.slane %v1724, 4
    %v1726 = vadd.f32 %v1724, %v1725
    %v1727 = vrot.slane %v1726, 2
    %v1728 = vadd.f32 %v1726, %v1727
    %v1729 = vrot.slane %v1728, 1
    %v1730 = vadd.f32 %v1728, %v1729
    %1731 = vst [vmem:[#allocation8] sm:$0x1] %v1730
    // Predicated region
    $region38: #{tpu_custom_call.1} parent=1 // pred_check
      _
    $region39: #{tpu_custom_call.1} parent=1 // pred_check_branch
      %1733 = sbr.rel (0) target = $region41
    $region40: #{tpu_custom_call.1} parent=1 // pred_region
      %s1735 = ssub.s32 16, 16
      %1736 = vsyncadd [#allocation4], %s1735
      %s1738 = sshll.u32 [#allocation8], 4
      %s1739 = int_to_ptr.vmem [resolvable:$true] %s1738
      %1741 = dma.vmem_to_hbm [thread:$0]  %s1739, 16, %s6, [#allocation4]
    $region41: #{tpu_custom_call.1} parent=1 // pred_fallthru
      _
    // Predicated region
    $region42: #{tpu_custom_call.1} parent=1 // pred_check
      _
    $region43: #{tpu_custom_call.1} parent=1 // pred_check_branch
      %1743 = sbr.rel (0) target = $region45
    $region44: #{tpu_custom_call.1} parent=1 // pred_region
      %1744 = dma.done [#allocation4], 16
    $region45: #{tpu_custom_call.1} parent=1 // pred_fallthru
      _
    %1745 = vsyncpa [#allocation3], 1
    %1746 = vsyncpa [#allocation6], 1
    %1747 = vsyncpa [#allocation4], 1

</llo_original>
